<compile_context>
chip_gen: v7x
topology: tpu7x:2x2x1
jax: 0.10.0
libtpu: 0.0.40
codegen_flags: <defaults>
</compile_context>

<pallas_src>
import functools

import jax
import jax.numpy as jnp
from jax.experimental import pallas as pl
from jax.experimental.pallas import tpu as pltpu


def _round_up(x, m):
    return (x + m - 1) // m * m


# ---------------------------------------------------------------------------
# Kernel
# ---------------------------------------------------------------------------
def eigdecomp_kernel(x_ref, w1_ref, b1_ref, w2_ref, b2_ref, sr_ref, sb_ref,
                     out_ref, *, N):
    """One batch tile: fused MLP + eigenvalue ReLU + eigenvector row L2-norm.

    Column layout of the (TB, P) output slab: [vals(N) | vecs(N*N) | zero pad].
    """
    NN = N * N
    P = out_ref.shape[-1]

    # Hidden layer (MXU, f32 accumulation) + bias + ReLU (VPU, f32 epilogue).
    h = jnp.dot(x_ref[...], w1_ref[...], preferred_element_type=jnp.float32)
    h = jnp.maximum(h + b1_ref[...], 0.0)

    # Single lane-dense head matmul over the padded column layout
    # [vals(N) | vecs(N*N) | zero pad]  -> one full-width MXU pass.
    h = h.astype(w2_ref.dtype)
    out = jnp.dot(h, w2_ref[...], preferred_element_type=jnp.float32) + b2_ref[...]

    # Two-stage grouped row-norm of the eigenvector block, on the FLAT layout
    # (no (B, N, N) reshape, no XLU cross-lane reduce), both stages on the MXU:
    #   stage 1: norm_sq_rows[b, r] = sum_{c in row r} out[b, c]^2   -> (TB, NPAD)
    #   stage 2: broadcast each row's 1/||v|| back onto its N columns -> (TB, P)
    # Padded "rows" (r >= N) have norm 0 -> rsqrt(eps) ~ 1e12, but they only hit
    # all-zero columns of sb, so inv_full is finite everywhere and is exactly 0
    # on eigenvalue / pad columns (no inf*0 paths).
    norm_sq_rows = jnp.dot(out * out, sr_ref[...],
                           preferred_element_type=jnp.float32)
    # rsqrt(max(||v||^2, 1e-24)) == 1 / max(||v||, 1e-12)  (torch F.normalize)
    inv_rows = jax.lax.rsqrt(jnp.maximum(norm_sq_rows, 1e-24))
    inv_full = jnp.dot(inv_rows, sb_ref[...],
                       preferred_element_type=jnp.float32)

    # Column selector: eigenvector columns get normalized; eigenvalue columns
    # get ReLU; zero-pad columns stay exactly zero (relu(0) = 0).
    col = jax.lax.broadcasted_iota(jnp.int32, (1, P), 1)
    is_vec = jnp.logical_and(col >= N, col < N + NN)
    out_ref[...] = jnp.where(is_vec, out * inv_full, jnp.maximum(out, 0.0))


# ---------------------------------------------------------------------------
# Parameters
# ---------------------------------------------------------------------------
def init_raw_params(key, N):
    """torch.nn.Linear-style init (U[-1/sqrt(fan_in), 1/sqrt(fan_in)]), float32."""
    k1, k2, k3, k4 = jax.random.split(key, 4)
    in1, hid, out2 = N * 64, 512, N + N * N
    s1 = 1.0 / float(in1) ** 0.5
    s2 = 1.0 / float(hid) ** 0.5
    w1 = jax.random.uniform(k1, (in1, hid), jnp.float32, -s1, s1)
    b1 = jax.random.uniform(k2, (1, hid), jnp.float32, -s1, s1)
    w2 = jax.random.uniform(k3, (hid, out2), jnp.float32, -s2, s2)
    b2 = jax.random.uniform(k4, (1, out2), jnp.float32, -s2, s2)
    return (w1, b1, w2, b2)


def pack_params(raw_params, N, compute_dtype=jnp.bfloat16):
    """Pad Linear #2 to a lane-aligned width P (multiple of 128) and build the
    two small 0/1 matrices used by the in-kernel eigenvector row-norm.

    bf16 is the default compute dtype for the big matmuls on every TPU
    generation (the MXU is bf16-native on v5e/v6e/v7x); accumulation and the
    epilogue stay f32.  Pass compute_dtype=jnp.float32 for bit-tight results.
    """
    w1, b1, w2, b2 = raw_params
    out2 = N + N * N
    P = _round_up(out2, 128)
    NPAD = _round_up(N, 128)

    w2p = jnp.pad(w2, ((0, 0), (0, P - out2)))
    b2p = jnp.pad(b2, ((0, 0), (0, P - out2)))

    # sr[c, r] = 1 iff padded column c belongs to eigenvector row r (stage 1);
    # sb = sr.T broadcasts the per-row scale back to the flat layout (stage 2).
    # O(P*N) memory instead of the previous O(P^2) block-diagonal matrix, so it
    # stays a few MiB even at N=64 (fits v7x's 64 MiB VMEM comfortably).
    col = jnp.arange(P)
    row_of_col = (col - N) // N
    is_vec_col = (col >= N) & (col < out2)
    rows = jnp.arange(NPAD)
    sr = ((row_of_col[:, None] == rows[None, :]) & is_vec_col[:, None]
          ).astype(jnp.float32)
    sb = sr.T

    return (w1.astype(compute_dtype),
            b1.astype(jnp.float32),
            w2p.astype(compute_dtype),
            b2p.astype(jnp.float32),
            sr, sb)


# ---------------------------------------------------------------------------
# Tiling / VMEM heuristics
# ---------------------------------------------------------------------------
def _pick_block_b(B, tb_max=512):
    """Batch-tile size: large enough to amortize the ~0.35 us/grid-step
    overhead (up to tb_max=512 rows), sublane(8)-aligned, and chosen so the
    1-D 'parallel' grid has an even number of steps for larger B so both
    TensorCores stay busy on v7x (v5e/v6e: single TC, unaffected)."""
    if B <= 16:
        return B                              # tiny batch: single exact tile
    n_steps = max(2, -(-B // tb_max))
    if n_steps % 2:
        n_steps += 1                          # even grid -> 2-way megacore
    tb = _round_up(-(-B // n_steps), 8)
    return max(8, min(tb, tb_max))


def _vmem_limit_bytes(TB, D, H, P, NPAD, in_itemsize):
    """Rough VMEM footprint of the kernel -> compiler limit (2x headroom,
    8 MiB floor).  A few MiB at N=8, so v7x keeps plenty of scoped headroom."""
    weights = D * H * in_itemsize + H * P * in_itemsize + (H + P) * 4  # resident
    smats = 2 * P * NPAD * 4                                           # sr + sb
    io = 2 * TB * D * in_itemsize + 2 * TB * P * 4                     # x/out x2 buf
    interm = TB * H * (4 + in_itemsize) + 3 * TB * P * 4 + 2 * TB * NPAD * 4
    est = weights + smats + io + interm
    return int(min(max(2 * est, 8 * 1024 * 1024), 96 * 1024 * 1024))


# ---------------------------------------------------------------------------
# Forward wrapper
# ---------------------------------------------------------------------------
_SINGLE_BUFFER_RESIDENT = True   # flipped off at runtime if this Pallas build
                                 # rejects pipeline_mode=pl.Buffered(1)


def _resident_spec(shape, single_buffer):
    """Whole-array operand with a constant index_map (never re-DMA'd across the
    grid).  With Buffered(1) it is also single-buffered, halving the resident
    weight VMEM (w1/w2p/sr/sb grow with N; matters for larger N on v7x)."""
    idx_map = lambda i: (0,) * len(shape)
    if single_buffer:
        return pl.BlockSpec(shape, idx_map, pipeline_mode=pl.Buffered(1))
    return pl.BlockSpec(shape, idx_map)


def eigen_decomposition_forward(x, params, *, block_b=None):
    """x: (B, N, 64). Returns (eigenvalues (B, N), eigenvectors (B, N, N)), f32."""
    global _SINGLE_BUFFER_RESIDENT
    w1, b1, w2p, b2p, sr, sb = params
    B = x.shape[0]
    D = w1.shape[0]          # N * 64
    H = w1.shape[1]          # 512
    N = D // 64
    NN = N * N
    P = w2p.shape[1]
    NPAD = sr.shape[1]

    x_flat = x.reshape(B, D).astype(w1.dtype)     # glue: flatten + cast in XLA

    if block_b is None:
        TB = _pick_block_b(B)
    else:
        TB = min(block_b, B)
        if TB < B:
            TB = _round_up(TB, 8)
    grid = (pl.cdiv(B, TB),)

    def run(single_buffer):
        in_specs = [
            pl.BlockSpec((TB, D), lambda i: (i, 0)),         # x tile (pipelined)
            _resident_spec(w1.shape, single_buffer),
            _resident_spec(b1.shape, single_buffer),
            _resident_spec(w2p.shape, single_buffer),
            _resident_spec(b2p.shape, single_buffer),
            _resident_spec(sr.shape, single_buffer),
            _resident_spec(sb.shape, single_buffer),
        ]
        return pl.pallas_call(
            functools.partial(eigdecomp_kernel, N=N),
            out_shape=jax.ShapeDtypeStruct((B, P), jnp.float32),
            grid_spec=pltpu.PrefetchScalarGridSpec(
                num_scalar_prefetch=0,
                grid=grid,
                in_specs=in_specs,
                out_specs=pl.BlockSpec((TB, P), lambda i: (i, 0)),  # lane-dense
            ),
            compiler_params=pltpu.CompilerParams(
                dimension_semantics=("parallel",),
                vmem_limit_bytes=_vmem_limit_bytes(
                    TB, D, H, P, NPAD, jnp.dtype(w1.dtype).itemsize),
            ),
        )(x_flat, w1, b1, w2p, b2p, sr, sb)

    if _SINGLE_BUFFER_RESIDENT:
        try:
            out = run(True)
        except Exception:
            # TODO(synk): pipeline_mode=pl.Buffered(1) unsupported by this
            # Pallas build; fall back to default double-buffered residents.
            _SINGLE_BUFFER_RESIDENT = False
            out = run(False)
    else:
        out = run(False)

    # TODO(synk): when N*N % 128 == 0 (N >= 16), emit two lane-dense outputs
    # (128-padded eigenvalues + a (B, N*N) eigenvector slab) instead of one
    # (B, P) slab, to avoid this unaligned-offset XLA slice re-reading the
    # whole slab in HBM.  For N=8 (NN=64) the single slab keeps stores unmasked.
    eigenvalues = out[:, :N]
    eigenvectors = out[:, N:N + NN].reshape(B, N, N)
    return eigenvalues, eigenvectors


# ---------------------------------------------------------------------------
# Reference + tests
# ---------------------------------------------------------------------------
def _reference(x, raw_params, N):
    """Pure-JAX reference of the PyTorch forward (unpadded f32 weights)."""
    w1, b1, w2, b2 = raw_params
    B = x.shape[0]
    xf = x.reshape(B, -1)
    h = jnp.maximum(xf @ w1 + b1, 0.0)
    out = h @ w2 + b2
    vals = jnp.maximum(out[:, :N], 0.0)
    vecs = out[:, N:].reshape(B, N, N)
    norm = jnp.sqrt(jnp.sum(vecs * vecs, axis=2, keepdims=True))
    return vals, vecs / jnp.maximum(norm, 1e-12)


if __name__ == "__main__":
    B, N = 2, 8                                  # small shapes: batch=2, N=8
    key = jax.random.PRNGKey(0)
    kx, kp = jax.random.split(key)
    x = jax.random.normal(kx, (B, N, 64), jnp.float32)
    raw = init_raw_params(kp, N)

    # --- f32 path, tiny batch (bit-tight validation) -------------------------
    params_f32 = pack_params(raw, N, compute_dtype=jnp.float32)
    eigvals, eigvecs = jax.block_until_ready(
        eigen_decomposition_forward(x, params_f32))
    ref_vals, ref_vecs = _reference(x, raw, N)
    assert eigvals.shape == (B, N) and eigvecs.shape == (B, N, N)
    assert jnp.allclose(eigvals, ref_vals, atol=1e-4, rtol=1e-4)
    assert jnp.allclose(eigvecs, ref_vecs, atol=5e-3, rtol=5e-3)

    # --- f32 path, larger batch exercising the multi-step "parallel" grid ----
    B2 = 256
    x2 = jax.random.normal(jax.random.PRNGKey(1), (B2, N, 64), jnp.float32)
    ev2, evec2 = jax.block_until_ready(
        eigen_decomposition_forward(x2, params_f32))
    rv2, rvec2 = _reference(x2, raw, N)
    assert ev2.shape == (B2, N) and evec2.shape == (B2, N, N)
    assert jnp.allclose(ev2, rv2, atol=1e-4, rtol=1e-4)
    assert jnp.allclose(evec2, rvec2, atol=5e-3, rtol=5e-3)

    # --- f32 path, batch NOT divisible by the tile (edge-tile writeback) -----
    B3 = 100
    x3 = jax.random.normal(jax.random.PRNGKey(2), (B3, N, 64), jnp.float32)
    ev3, evec3 = jax.block_until_ready(
        eigen_decomposition_forward(x3, params_f32))
    rv3, rvec3 = _reference(x3, raw, N)
    assert ev3.shape == (B3, N) and evec3.shape == (B3, N, N)
    assert jnp.allclose(ev3, rv3, atol=1e-4, rtol=1e-4)
    assert jnp.allclose(evec3, rvec3, atol=5e-3, rtol=5e-3)

    # --- default bf16 path (MXU-native on v5e/v6e/v7x; f32 acc + epilogue) ---
    params_bf16 = pack_params(raw, N)            # bf16 is now the default
    ev4, evec4 = jax.block_until_ready(
        eigen_decomposition_forward(x2, params_bf16))
    assert jnp.allclose(ev4, rv2, atol=5e-2, rtol=5e-2)
    assert jnp.allclose(evec4, rvec2, atol=5e-2, rtol=5e-2)
    # direction check for the normalized eigenvector rows (unit-norm rows)
    cos = jnp.sum(evec4 * rvec2, axis=2)
    assert jnp.all(cos > 0.99)

    print("KERNEL_OK")
</pallas_src>

<mosaic_0001>
module attributes {stable_mosaic.version = 11 : i64} {
  func.func @eigdecomp_kernel(%arg0: i32, %arg1: memref<2x512xf32, #tpu.memory_space<vmem>>, %arg2: memref<512x512xf32, #tpu.memory_space<vmem>>, %arg3: memref<1x512xf32, #tpu.memory_space<vmem>>, %arg4: memref<512x128xf32, #tpu.memory_space<vmem>>, %arg5: memref<1x128xf32, #tpu.memory_space<vmem>>, %arg6: memref<128x128xf32, #tpu.memory_space<vmem>>, %arg7: memref<128x128xf32, #tpu.memory_space<vmem>>, %arg8: memref<2x128xf32, #tpu.memory_space<vmem>>) attributes {dimension_semantics = [#tpu.dimension_semantics<parallel>], iteration_bounds = array<i64: 1>, scalar_prefetch = 0 : i64, scratch_operands = 0 : i64, tpu.core_type = #tpu.core_type<tc>, window_params = [{transform_indices = @transform_0, window_bounds = array<i64: 2, 512>}, {pipeline_mode = #tpu.pipeline_mode<synchronous>, transform_indices = @transform_1, window_bounds = array<i64: 512, 512>}, {pipeline_mode = #tpu.pipeline_mode<synchronous>, transform_indices = @transform_2, window_bounds = array<i64: 1, 512>}, {pipeline_mode = #tpu.pipeline_mode<synchronous>, transform_indices = @transform_3, window_bounds = array<i64: 512, 128>}, {pipeline_mode = #tpu.pipeline_mode<synchronous>, transform_indices = @transform_4, window_bounds = array<i64: 1, 128>}, {pipeline_mode = #tpu.pipeline_mode<synchronous>, transform_indices = @transform_5, window_bounds = array<i64: 128, 128>}, {pipeline_mode = #tpu.pipeline_mode<synchronous>, transform_indices = @transform_6, window_bounds = array<i64: 128, 128>}, {transform_indices = @transform_7, window_bounds = array<i64: 2, 128>}]} {
    %c0 = arith.constant 0 : index
    %c0_0 = arith.constant 0 : index
    %0 = vector.load %arg1[%c0, %c0_0] : memref<2x512xf32, #tpu.memory_space<vmem>>, vector<2x512xf32>
    %c0_1 = arith.constant 0 : index
    %c0_2 = arith.constant 0 : index
    %1 = vector.load %arg2[%c0_1, %c0_2] : memref<512x512xf32, #tpu.memory_space<vmem>>, vector<512x512xf32>
    %cst = arith.constant dense<0.000000e+00> : vector<2x512xf32>
    %2 = tpu.matmul %0, %1, %cst {dimension_numbers = #tpu.dot_dimension_numbers<[1], [0], [0], [1], [0, 0, 1, 1], [], []>} : vector<2x512xf32>, vector<512x512xf32>, vector<2x512xf32> -> vector<2x512xf32>
    %c0_3 = arith.constant 0 : index
    %c0_4 = arith.constant 0 : index
    %3 = vector.load %arg3[%c0_3, %c0_4] : memref<1x512xf32, #tpu.memory_space<vmem>>, vector<1x512xf32>
    %4 = vector.broadcast %3 : vector<1x512xf32> to vector<2x512xf32>
    %5 = arith.addf %2, %4 : vector<2x512xf32>
    %cst_5 = arith.constant 0.000000e+00 : f32
    %6 = vector.broadcast %cst_5 : f32 to vector<2x512xf32>
    %7 = arith.maximumf %5, %6 : vector<2x512xf32>
    %c0_6 = arith.constant 0 : index
    %c0_7 = arith.constant 0 : index
    %8 = vector.load %arg4[%c0_6, %c0_7] : memref<512x128xf32, #tpu.memory_space<vmem>>, vector<512x128xf32>
    %cst_8 = arith.constant dense<0.000000e+00> : vector<2x128xf32>
    %9 = tpu.matmul %7, %8, %cst_8 {dimension_numbers = #tpu.dot_dimension_numbers<[1], [0], [0], [1], [0, 0, 1, 1], [], []>} : vector<2x512xf32>, vector<512x128xf32>, vector<2x128xf32> -> vector<2x128xf32>
    %c0_9 = arith.constant 0 : index
    %c0_10 = arith.constant 0 : index
    %10 = vector.load %arg5[%c0_9, %c0_10] : memref<1x128xf32, #tpu.memory_space<vmem>>, vector<1x128xf32>
    %11 = vector.broadcast %10 : vector<1x128xf32> to vector<2x128xf32>
    %12 = arith.addf %9, %11 : vector<2x128xf32>
    %13 = arith.mulf %12, %12 : vector<2x128xf32>
    %c0_11 = arith.constant 0 : index
    %c0_12 = arith.constant 0 : index
    %14 = vector.load %arg6[%c0_11, %c0_12] : memref<128x128xf32, #tpu.memory_space<vmem>>, vector<128x128xf32>
    %cst_13 = arith.constant dense<0.000000e+00> : vector<2x128xf32>
    %15 = tpu.matmul %13, %14, %cst_13 {dimension_numbers = #tpu.dot_dimension_numbers<[1], [0], [0], [1], [0, 0, 1, 1], [], []>} : vector<2x128xf32>, vector<128x128xf32>, vector<2x128xf32> -> vector<2x128xf32>
    %cst_14 = arith.constant 1.000000e-24 : f32
    %16 = vector.broadcast %cst_14 : f32 to vector<2x128xf32>
    %17 = arith.maximumf %15, %16 : vector<2x128xf32>
    %18 = math.rsqrt %17 : vector<2x128xf32>
    %c0_15 = arith.constant 0 : index
    %c0_16 = arith.constant 0 : index
    %19 = vector.load %arg7[%c0_15, %c0_16] : memref<128x128xf32, #tpu.memory_space<vmem>>, vector<128x128xf32>
    %cst_17 = arith.constant dense<0.000000e+00> : vector<2x128xf32>
    %20 = tpu.matmul %18, %19, %cst_17 {dimension_numbers = #tpu.dot_dimension_numbers<[1], [0], [0], [1], [0, 0, 1, 1], [], []>} : vector<2x128xf32>, vector<128x128xf32>, vector<2x128xf32> -> vector<2x128xf32>
    %21 = tpu.iota {dimensions = array<i32: 1>} : vector<1x128xi32>
    %c8_i32 = arith.constant 8 : i32
    %22 = vector.broadcast %c8_i32 : i32 to vector<1x128xi32>
    %23 = arith.cmpi sge, %21, %22 : vector<1x128xi32>
    %c72_i32 = arith.constant 72 : i32
    %24 = vector.broadcast %c72_i32 : i32 to vector<1x128xi32>
    %25 = arith.cmpi slt, %21, %24 : vector<1x128xi32>
    %26 = arith.andi %23, %25 : vector<1x128xi1>
    %27 = arith.mulf %12, %20 : vector<2x128xf32>
    %cst_18 = arith.constant 0.000000e+00 : f32
    %28 = vector.broadcast %cst_18 : f32 to vector<2x128xf32>
    %29 = arith.maximumf %12, %28 : vector<2x128xf32>
    %30 = vector.shape_cast %26 : vector<1x128xi1> to vector<1x128xi1>
    %31 = vector.broadcast %30 : vector<1x128xi1> to vector<2x128xi1>
    %32 = arith.select %31, %27, %29 : vector<2x128xi1>, vector<2x128xf32>
    %c0_19 = arith.constant 0 : index
    %c0_20 = arith.constant 0 : index
    %33 = vector.load %arg8[%c0_19, %c0_20] : memref<2x128xf32, #tpu.memory_space<vmem>>, vector<2x128xf32>
    tpu.vector_store %arg8[%c0_19, %c0_20], %32 {strides = array<i32>} : memref<2x128xf32, #tpu.memory_space<vmem>>, vector<2x128xf32>,
    return
  }
  func.func @transform_0(%arg0: i32) -> (i32, i32) {
    %c0_i32 = arith.constant 0 : i32
    %c0_i32_0 = arith.constant 0 : i32
    return %arg0, %c0_i32 : i32, i32
  }
  func.func @transform_1(%arg0: i32) -> (i32, i32) {
    %c0_i32 = arith.constant 0 : i32
    %c0_i32_0 = arith.constant 0 : i32
    %c0_i32_1 = arith.constant 0 : i32
    return %c0_i32, %c0_i32_0 : i32, i32
  }
  func.func @transform_2(%arg0: i32) -> (i32, i32) {
    %c0_i32 = arith.constant 0 : i32
    %c0_i32_0 = arith.constant 0 : i32
    %c0_i32_1 = arith.constant 0 : i32
    return %c0_i32, %c0_i32_0 : i32, i32
  }
  func.func @transform_3(%arg0: i32) -> (i32, i32) {
    %c0_i32 = arith.constant 0 : i32
    %c0_i32_0 = arith.constant 0 : i32
    %c0_i32_1 = arith.constant 0 : i32
    return %c0_i32, %c0_i32_0 : i32, i32
  }
  func.func @transform_4(%arg0: i32) -> (i32, i32) {
    %c0_i32 = arith.constant 0 : i32
    %c0_i32_0 = arith.constant 0 : i32
    %c0_i32_1 = arith.constant 0 : i32
    return %c0_i32, %c0_i32_0 : i32, i32
  }
  func.func @transform_5(%arg0: i32) -> (i32, i32) {
    %c0_i32 = arith.constant 0 : i32
    %c0_i32_0 = arith.constant 0 : i32
    %c0_i32_1 = arith.constant 0 : i32
    return %c0_i32, %c0_i32_0 : i32, i32
  }
  func.func @transform_6(%arg0: i32) -> (i32, i32) {
    %c0_i32 = arith.constant 0 : i32
    %c0_i32_0 = arith.constant 0 : i32
    %c0_i32_1 = arith.constant 0 : i32
    return %c0_i32, %c0_i32_0 : i32, i32
  }
  func.func @transform_7(%arg0: i32) -> (i32, i32) {
    %c0_i32 = arith.constant 0 : i32
    %c0_i32_0 = arith.constant 0 : i32
    return %arg0, %c0_i32 : i32, i32
  }
}

module attributes {stable_mosaic.version = 11 : i64} {
  func.func @eigdecomp_kernel(%arg0: i32, %arg1: memref<2x512xf32, #tpu.memory_space<vmem>>, %arg2: memref<512x512xf32, #tpu.memory_space<vmem>>, %arg3: memref<1x512xf32, #tpu.memory_space<vmem>>, %arg4: memref<512x128xf32, #tpu.memory_space<vmem>>, %arg5: memref<1x128xf32, #tpu.memory_space<vmem>>, %arg6: memref<128x128xf32, #tpu.memory_space<vmem>>, %arg7: memref<128x128xf32, #tpu.memory_space<vmem>>, %arg8: memref<2x128xf32, #tpu.memory_space<vmem>>) attributes {dimension_semantics = [#tpu.dimension_semantics<parallel>], iteration_bounds = array<i64: 1>, scalar_prefetch = 0 : i64, scratch_operands = 0 : i64, tpu.core_type = #tpu.core_type<tc>, window_params = [{transform_indices = @transform_0, window_bounds = array<i64: 2, 512>}, {pipeline_mode = #tpu.pipeline_mode<synchronous>, transform_indices = @transform_1, window_bounds = array<i64: 512, 512>}, {pipeline_mode = #tpu.pipeline_mode<synchronous>, transform_indices = @transform_2, window_bounds = array<i64: 1, 512>}, {pipeline_mode = #tpu.pipeline_mode<synchronous>, transform_indices = @transform_3, window_bounds = array<i64: 512, 128>}, {pipeline_mode = #tpu.pipeline_mode<synchronous>, transform_indices = @transform_4, window_bounds = array<i64: 1, 128>}, {pipeline_mode = #tpu.pipeline_mode<synchronous>, transform_indices = @transform_5, window_bounds = array<i64: 128, 128>}, {pipeline_mode = #tpu.pipeline_mode<synchronous>, transform_indices = @transform_6, window_bounds = array<i64: 128, 128>}, {transform_indices = @transform_7, window_bounds = array<i64: 2, 128>}]} {
    %c0 = arith.constant 0 : index
    %c0_0 = arith.constant 0 : index
    %0 = vector.load %arg1[%c0, %c0_0] : memref<2x512xf32, #tpu.memory_space<vmem>>, vector<2x512xf32>
    %c0_1 = arith.constant 0 : index
    %c0_2 = arith.constant 0 : index
    %1 = vector.load %arg2[%c0_1, %c0_2] : memref<512x512xf32, #tpu.memory_space<vmem>>, vector<512x512xf32>
    %cst = arith.constant dense<0.000000e+00> : vector<2x512xf32>
    %2 = tpu.matmul %0, %1, %cst {dimension_numbers = #tpu.dot_dimension_numbers<[1], [0], [0], [1], [0, 0, 1, 1], [], []>} : vector<2x512xf32>, vector<512x512xf32>, vector<2x512xf32> -> vector<2x512xf32>
    %c0_3 = arith.constant 0 : index
    %c0_4 = arith.constant 0 : index
    %3 = vector.load %arg3[%c0_3, %c0_4] : memref<1x512xf32, #tpu.memory_space<vmem>>, vector<1x512xf32>
    %4 = vector.broadcast %3 : vector<1x512xf32> to vector<2x512xf32>
    %5 = arith.addf %2, %4 : vector<2x512xf32>
    %cst_5 = arith.constant 0.000000e+00 : f32
    %6 = vector.broadcast %cst_5 : f32 to vector<2x512xf32>
    %7 = arith.maximumf %5, %6 : vector<2x512xf32>
    %c0_6 = arith.constant 0 : index
    %c0_7 = arith.constant 0 : index
    %8 = vector.load %arg4[%c0_6, %c0_7] : memref<512x128xf32, #tpu.memory_space<vmem>>, vector<512x128xf32>
    %cst_8 = arith.constant dense<0.000000e+00> : vector<2x128xf32>
    %9 = tpu.matmul %7, %8, %cst_8 {dimension_numbers = #tpu.dot_dimension_numbers<[1], [0], [0], [1], [0, 0, 1, 1], [], []>} : vector<2x512xf32>, vector<512x128xf32>, vector<2x128xf32> -> vector<2x128xf32>
    %c0_9 = arith.constant 0 : index
    %c0_10 = arith.constant 0 : index
    %10 = vector.load %arg5[%c0_9, %c0_10] : memref<1x128xf32, #tpu.memory_space<vmem>>, vector<1x128xf32>
    %11 = vector.broadcast %10 : vector<1x128xf32> to vector<2x128xf32>
    %12 = arith.addf %9, %11 : vector<2x128xf32>
    %13 = arith.mulf %12, %12 : vector<2x128xf32>
    %c0_11 = arith.constant 0 : index
    %c0_12 = arith.constant 0 : index
    %14 = vector.load %arg6[%c0_11, %c0_12] : memref<128x128xf32, #tpu.memory_space<vmem>>, vector<128x128xf32>
    %cst_13 = arith.constant dense<0.000000e+00> : vector<2x128xf32>
    %15 = tpu.matmul %13, %14, %cst_13 {dimension_numbers = #tpu.dot_dimension_numbers<[1], [0], [0], [1], [0, 0, 1, 1], [], []>} : vector<2x128xf32>, vector<128x128xf32>, vector<2x128xf32> -> vector<2x128xf32>
    %cst_14 = arith.constant 1.000000e-24 : f32
    %16 = vector.broadcast %cst_14 : f32 to vector<2x128xf32>
    %17 = arith.maximumf %15, %16 : vector<2x128xf32>
    %18 = math.rsqrt %17 : vector<2x128xf32>
    %c0_15 = arith.constant 0 : index
    %c0_16 = arith.constant 0 : index
    %19 = vector.load %arg7[%c0_15, %c0_16] : memref<128x128xf32, #tpu.memory_space<vmem>>, vector<128x128xf32>
    %cst_17 = arith.constant dense<0.000000e+00> : vector<2x128xf32>
    %20 = tpu.matmul %18, %19, %cst_17 {dimension_numbers = #tpu.dot_dimension_numbers<[1], [0], [0], [1], [0, 0, 1, 1], [], []>} : vector<2x128xf32>, vector<128x128xf32>, vector<2x128xf32> -> vector<2x128xf32>
    %21 = tpu.iota {dimensions = array<i32: 1>} : vector<1x128xi32>
    %c8_i32 = arith.constant 8 : i32
    %22 = vector.broadcast %c8_i32 : i32 to vector<1x128xi32>
    %23 = arith.cmpi sge, %21, %22 : vector<1x128xi32>
    %c72_i32 = arith.constant 72 : i32
    %24 = vector.broadcast %c72_i32 : i32 to vector<1x128xi32>
    %25 = arith.cmpi slt, %21, %24 : vector<1x128xi32>
    %26 = arith.andi %23, %25 : vector<1x128xi1>
    %27 = arith.mulf %12, %20 : vector<2x128xf32>
    %cst_18 = arith.constant 0.000000e+00 : f32
    %28 = vector.broadcast %cst_18 : f32 to vector<2x128xf32>
    %29 = arith.maximumf %12, %28 : vector<2x128xf32>
    %30 = vector.shape_cast %26 : vector<1x128xi1> to vector<1x128xi1>
    %31 = vector.broadcast %30 : vector<1x128xi1> to vector<2x128xi1>
    %32 = arith.select %31, %27, %29 : vector<2x128xi1>, vector<2x128xf32>
    %c0_19 = arith.constant 0 : index
    %c0_20 = arith.constant 0 : index
    %33 = vector.load %arg8[%c0_19, %c0_20] : memref<2x128xf32, #tpu.memory_space<vmem>>, vector<2x128xf32>
    tpu.vector_store %arg8[%c0_19, %c0_20], %32 {strides = array<i32>} : memref<2x128xf32, #tpu.memory_space<vmem>>, vector<2x128xf32>,
    return
  }
  func.func @transform_0(%arg0: i32) -> (i32, i32) {
    %c0_i32 = arith.constant 0 : i32
    %c0_i32_0 = arith.constant 0 : i32
    return %arg0, %c0_i32 : i32, i32
  }
  func.func @transform_1(%arg0: i32) -> (i32, i32) {
    %c0_i32 = arith.constant 0 : i32
    %c0_i32_0 = arith.constant 0 : i32
    %c0_i32_1 = arith.constant 0 : i32
    return %c0_i32, %c0_i32_0 : i32, i32
  }
  func.func @transform_2(%arg0: i32) -> (i32, i32) {
    %c0_i32 = arith.constant 0 : i32
    %c0_i32_0 = arith.constant 0 : i32
    %c0_i32_1 = arith.constant 0 : i32
    return %c0_i32, %c0_i32_0 : i32, i32
  }
  func.func @transform_3(%arg0: i32) -> (i32, i32) {
    %c0_i32 = arith.constant 0 : i32
    %c0_i32_0 = arith.constant 0 : i32
    %c0_i32_1 = arith.constant 0 : i32
    return %c0_i32, %c0_i32_0 : i32, i32
  }
  func.func @transform_4(%arg0: i32) -> (i32, i32) {
    %c0_i32 = arith.constant 0 : i32
    %c0_i32_0 = arith.constant 0 : i32
    %c0_i32_1 = arith.constant 0 : i32
    return %c0_i32, %c0_i32_0 : i32, i32
  }
  func.func @transform_5(%arg0: i32) -> (i32, i32) {
    %c0_i32 = arith.constant 0 : i32
    %c0_i32_0 = arith.constant 0 : i32
    %c0_i32_1 = arith.constant 0 : i32
    return %c0_i32, %c0_i32_0 : i32, i32
  }
  func.func @transform_6(%arg0: i32) -> (i32, i32) {
    %c0_i32 = arith.constant 0 : i32
    %c0_i32_0 = arith.constant 0 : i32
    %c0_i32_1 = arith.constant 0 : i32
    return %c0_i32, %c0_i32_0 : i32, i32
  }
  func.func @transform_7(%arg0: i32) -> (i32, i32) {
    %c0_i32 = arith.constant 0 : i32
    %c0_i32_0 = arith.constant 0 : i32
    return %arg0, %c0_i32 : i32, i32
  }
}

</mosaic_0001>

<llo_original>
// kernel: tpu_custom_call.1
$region0: #{tpu_custom_call.1}
  #allocation0 [shape = 'u32[]', space=smem, size = 0x4, offset = 0x4, fixed_abs, tag = 'smem constant byte address 0x4 - core index']
  #allocation1 [shape = 'u32[144,128]{1,0:T(1,128)}', space=vmem, size = 0x12000, scoped, tag = 'internal scratch']
  %s0 = inlined_call_operand.hbm [shape: f32[2,512], index: 0, kind: input, shape index: {}]
  %s1 = inlined_call_operand.hbm [shape: f32[512,512], index: 1, kind: input, shape index: {}]
  %s2 = inlined_call_operand.vmem [shape: f32[1,512], index: 2, kind: input, shape index: {}]
  %s3 = inlined_call_operand.hbm [shape: f32[512,128], index: 3, kind: input, shape index: {}]
  %s4 = inlined_call_operand.vmem [shape: f32[1,128], index: 4, kind: input, shape index: {}]
  %s5 = inlined_call_operand.hbm [shape: f32[128,128], index: 5, kind: input, shape index: {}]
  %s6 = inlined_call_operand.hbm [shape: f32[128,128], index: 6, kind: input, shape index: {}]
  %s7 = inlined_call_operand.hbm [shape: f32[2,128], index: 7, kind: output, shape index: {}]
  %s8 = sld [smem:[#allocation0]]
  $region58: #{tpu_custom_call.1} parent=0
    _
  %s10 = ssub.s32 1, %s8
  %s11 = scalar_select 0, %s10, %s8
  $region1: #{tpu_custom_call.1} parent=0
    #allocation2 [shape = 'u8[4096]{0}', space=vmem, size = 0x1000, scoped, tag = 'input window, operand 0, single buffered']
    #allocation3 [shape = 's32[1]{0}', space=sflag, size = 0x4, scoped, tag = 'scoped memory for tpu_custom_call.1']
    #allocation4 [shape = 's32[1]{0}', space=sflag, size = 0x4, scoped, tag = 'scoped memory for tpu_custom_call.1']
    #allocation5 [shape = 'u8[1048576]{0}', space=vmem, size = 0x100000, scoped, tag = 'input window, operand 1, single buffered']
    #allocation6 [shape = 's32[1]{0}', space=sflag, size = 0x4, scoped, tag = 'scoped memory for tpu_custom_call.1']
    #allocation7 [shape = 'u8[262144]{0}', space=vmem, size = 0x40000, scoped, tag = 'input window, operand 3, single buffered']
    #allocation8 [shape = 'u8[65536]{0}', space=vmem, size = 0x10000, scoped, tag = 'input window, operand 5, single buffered']
    #allocation9 [shape = 's32[1]{0}', space=sflag, size = 0x4, scoped, tag = 'scoped memory for tpu_custom_call.1']
    #allocation10 [shape = 'u8[65536]{0}', space=vmem, size = 0x10000, scoped, tag = 'input window, operand 6, single buffered']
    #allocation11 [shape = 'u8[1024]{0}', space=vmem, size = 0x400, scoped, tag = 'output window, operand 0, single buffered']
    %12 = vsyncpa [#allocation3], 0
    %13 = vsyncpa [#allocation6], 0
    %14 = vsyncpa [#allocation9], 0
    %15 = vsyncpa [#allocation4], 0
    // Predicated region
    $region2: #{tpu_custom_call.1} parent=1 // pred_check
      _
    $region3: #{tpu_custom_call.1} parent=1 // pred_check_branch
      %17 = sbr.rel (0) target = $region5
    $region4: #{tpu_custom_call.1} parent=1 // pred_region
      %s19 = ssub.s32 128, 128
      %20 = vsyncadd [#allocation3], %s19
      %s22 = sshll.u32 [#allocation2], 4
      %s23 = int_to_ptr.vmem [resolvable:$true] %s22
      %25 = dma.hbm_to_vmem [thread:$0]  %s0, 128, %s23, [#allocation3]
    $region5: #{tpu_custom_call.1} parent=1 // pred_fallthru
      _
    // Predicated region
    $region6: #{tpu_custom_call.1} parent=1 // pred_check
      _
    $region7: #{tpu_custom_call.1} parent=1 // pred_check_branch
      %27 = sbr.rel (0) target = $region9
    $region8: #{tpu_custom_call.1} parent=1 // pred_region
      %s29 = ssub.s32 32768, 32768
      %30 = vsyncadd [#allocation6], %s29
      %s31 = sshll.u32 [#allocation5], 4
      %s32 = int_to_ptr.vmem [resolvable:$true] %s31
      %37 = dma.hbm_to_vmem [thread:$0]  %s1, 32768, %s32, [#allocation6], 512, 512, 32
    $region9: #{tpu_custom_call.1} parent=1 // pred_fallthru
      _
    // Predicated region
    $region10: #{tpu_custom_call.1} parent=1 // pred_check
      _
    $region11: #{tpu_custom_call.1} parent=1 // pred_check_branch
      %39 = sbr.rel (0) target = $region13
    $region12: #{tpu_custom_call.1} parent=1 // pred_region
      _
    $region13: #{tpu_custom_call.1} parent=1 // pred_fallthru
      _
    // Predicated region
    $region14: #{tpu_custom_call.1} parent=1 // pred_check
      _
    $region15: #{tpu_custom_call.1} parent=1 // pred_check_branch
      %41 = sbr.rel (0) target = $region17
    $region16: #{tpu_custom_call.1} parent=1 // pred_region
      %s43 = ssub.s32 8192, 8192
      %44 = vsyncadd [#allocation6], %s43
      %s45 = sshll.u32 [#allocation7], 4
      %s46 = int_to_ptr.vmem [resolvable:$true] %s45
      %51 = dma.hbm_to_vmem [thread:$0]  %s3, 8192, %s46, [#allocation6], 128, 128, 8
    $region17: #{tpu_custom_call.1} parent=1 // pred_fallthru
      _
    // Predicated region
    $region18: #{tpu_custom_call.1} parent=1 // pred_check
      _
    $region19: #{tpu_custom_call.1} parent=1 // pred_check_branch
      %53 = sbr.rel (0) target = $region21
    $region20: #{tpu_custom_call.1} parent=1 // pred_region
      _
    $region21: #{tpu_custom_call.1} parent=1 // pred_fallthru
      _
    // Predicated region
    $region22: #{tpu_custom_call.1} parent=1 // pred_check
      _
    $region23: #{tpu_custom_call.1} parent=1 // pred_check_branch
      %55 = sbr.rel (0) target = $region25
    $region24: #{tpu_custom_call.1} parent=1 // pred_region
      %s57 = ssub.s32 2048, 2048
      %58 = vsyncadd [#allocation9], %s57
      %s59 = sshll.u32 [#allocation8], 4
      %s60 = int_to_ptr.vmem [resolvable:$true] %s59
      %65 = dma.hbm_to_vmem [thread:$0]  %s5, 2048, %s60, [#allocation9], 128, 128, 8
    $region25: #{tpu_custom_call.1} parent=1 // pred_fallthru
      _
    // Predicated region
    $region26: #{tpu_custom_call.1} parent=1 // pred_check
      _
    $region27: #{tpu_custom_call.1} parent=1 // pred_check_branch
      %67 = sbr.rel (0) target = $region29
    $region28: #{tpu_custom_call.1} parent=1 // pred_region
      %s69 = ssub.s32 2048, 2048
      %70 = vsyncadd [#allocation9], %s69
      %s71 = sshll.u32 [#allocation10], 4
      %s72 = int_to_ptr.vmem [resolvable:$true] %s71
      %77 = dma.hbm_to_vmem [thread:$0]  %s6, 2048, %s72, [#allocation9], 128, 128, 8
    $region29: #{tpu_custom_call.1} parent=1 // pred_fallthru
      _
    // Predicated region
    $region30: #{tpu_custom_call.1} parent=1 // pred_check
      _
    $region31: #{tpu_custom_call.1} parent=1 // pred_check_branch
      %79 = sbr.rel (0) target = $region33
    $region32: #{tpu_custom_call.1} parent=1 // pred_region
      %80 = dma.done [#allocation3], 128
    $region33: #{tpu_custom_call.1} parent=1 // pred_fallthru
      _
    // Predicated region
    $region34: #{tpu_custom_call.1} parent=1 // pred_check
      _
    $region35: #{tpu_custom_call.1} parent=1 // pred_check_branch
      %82 = sbr.rel (0) target = $region37
    $region36: #{tpu_custom_call.1} parent=1 // pred_region
      %83 = dma.done [#allocation6], 32768
    $region37: #{tpu_custom_call.1} parent=1 // pred_fallthru
      _
    // Predicated region
    $region38: #{tpu_custom_call.1} parent=1 // pred_check
      _
    $region39: #{tpu_custom_call.1} parent=1 // pred_check_branch
      %85 = sbr.rel (0) target = $region41
    $region40: #{tpu_custom_call.1} parent=1 // pred_region
      %86 = dma.done [#allocation6], 8192
    $region41: #{tpu_custom_call.1} parent=1 // pred_fallthru
      _
    // Predicated region
    $region42: #{tpu_custom_call.1} parent=1 // pred_check
      _
    $region43: #{tpu_custom_call.1} parent=1 // pred_check_branch
      %88 = sbr.rel (0) target = $region45
    $region44: #{tpu_custom_call.1} parent=1 // pred_region
      %89 = dma.done [#allocation9], 2048
    $region45: #{tpu_custom_call.1} parent=1 // pred_fallthru
      _
    // Predicated region
    $region46: #{tpu_custom_call.1} parent=1 // pred_check
      _
    $region47: #{tpu_custom_call.1} parent=1 // pred_check_branch
      %91 = sbr.rel (0) target = $region49
    $region48: #{tpu_custom_call.1} parent=1 // pred_region
      %92 = dma.done [#allocation9], 2048
    $region49: #{tpu_custom_call.1} parent=1 // pred_fallthru
      _
    %v93 = vld [vmem:[#allocation2] sm:$0xff]
    %v94 = vld [vmem:[#allocation5] sm:$0xff]
    %v95 = vld [vmem:[#allocation5 + $0x8] sm:$0xff]
    %v96 = vld [vmem:[#allocation5 + $0x10] sm:$0xff]
    %v97 = vld [vmem:[#allocation5 + $0x18] sm:$0xff]
    %v98 = vld [vmem:[#allocation5 + $0x20] sm:$0xff]
    %v99 = vld [vmem:[#allocation5 + $0x28] sm:$0xff]
    %v100 = vld [vmem:[#allocation5 + $0x30] sm:$0xff]
    %v101 = vld [vmem:[#allocation5 + $0x38] sm:$0xff]
    %v102 = vld [vmem:[#allocation5 + $0x40] sm:$0xff]
    %v103 = vld [vmem:[#allocation5 + $0x48] sm:$0xff]
    %v104 = vld [vmem:[#allocation5 + $0x50] sm:$0xff]
    %v105 = vld [vmem:[#allocation5 + $0x58] sm:$0xff]
    %v106 = vld [vmem:[#allocation5 + $0x60] sm:$0xff]
    %v107 = vld [vmem:[#allocation5 + $0x68] sm:$0xff]
    %v108 = vld [vmem:[#allocation5 + $0x70] sm:$0xff]
    %v109 = vld [vmem:[#allocation5 + $0x78] sm:$0xff]
    %v110 = vld [vmem:[#allocation5 + $0x80] sm:$0xff]
    %v111 = vld [vmem:[#allocation5 + $0x88] sm:$0xff]
    %v112 = vld [vmem:[#allocation5 + $0x90] sm:$0xff]
    %v113 = vld [vmem:[#allocation5 + $0x98] sm:$0xff]
    %v114 = vld [vmem:[#allocation5 + $0xa0] sm:$0xff]
    %v115 = vld [vmem:[#allocation5 + $0xa8] sm:$0xff]
    %v116 = vld [vmem:[#allocation5 + $0xb0] sm:$0xff]
    %v117 = vld [vmem:[#allocation5 + $0xb8] sm:$0xff]
    %v118 = vld [vmem:[#allocation5 + $0xc0] sm:$0xff]
    %v119 = vld [vmem:[#allocation5 + $0xc8] sm:$0xff]
    %v120 = vld [vmem:[#allocation5 + $0xd0] sm:$0xff]
    %v121 = vld [vmem:[#allocation5 + $0xd8] sm:$0xff]
    %v122 = vld [vmem:[#allocation5 + $0xe0] sm:$0xff]
    %v123 = vld [vmem:[#allocation5 + $0xe8] sm:$0xff]
    %v124 = vld [vmem:[#allocation5 + $0xf0] sm:$0xff]
    %v125 = vld [vmem:[#allocation5 + $0xf8] sm:$0xff]
    %v126 = vld [vmem:[#allocation5 + $0x100] sm:$0xff]
    %v127 = vld [vmem:[#allocation5 + $0x108] sm:$0xff]
    %v128 = vld [vmem:[#allocation5 + $0x110] sm:$0xff]
    %v129 = vld [vmem:[#allocation5 + $0x118] sm:$0xff]
    %v130 = vld [vmem:[#allocation5 + $0x120] sm:$0xff]
    %v131 = vld [vmem:[#allocation5 + $0x128] sm:$0xff]
    %v132 = vld [vmem:[#allocation5 + $0x130] sm:$0xff]
    %v133 = vld [vmem:[#allocation5 + $0x138] sm:$0xff]
    %v134 = vld [vmem:[#allocation5 + $0x140] sm:$0xff]
    %v135 = vld [vmem:[#allocation5 + $0x148] sm:$0xff]
    %v136 = vld [vmem:[#allocation5 + $0x150] sm:$0xff]
    %v137 = vld [vmem:[#allocation5 + $0x158] sm:$0xff]
    %v138 = vld [vmem:[#allocation5 + $0x160] sm:$0xff]
    %v139 = vld [vmem:[#allocation5 + $0x168] sm:$0xff]
    %v140 = vld [vmem:[#allocation5 + $0x170] sm:$0xff]
    %v141 = vld [vmem:[#allocation5 + $0x178] sm:$0xff]
    %v142 = vld [vmem:[#allocation5 + $0x180] sm:$0xff]
    %v143 = vld [vmem:[#allocation5 + $0x188] sm:$0xff]
    %v144 = vld [vmem:[#allocation5 + $0x190] sm:$0xff]
    %v145 = vld [vmem:[#allocation5 + $0x198] sm:$0xff]
    %v146 = vld [vmem:[#allocation5 + $0x1a0] sm:$0xff]
    %v147 = vld [vmem:[#allocation5 + $0x1a8] sm:$0xff]
    %v148 = vld [vmem:[#allocation5 + $0x1b0] sm:$0xff]
    %v149 = vld [vmem:[#allocation5 + $0x1b8] sm:$0xff]
    %v150 = vld [vmem:[#allocation5 + $0x1c0] sm:$0xff]
    %v151 = vld [vmem:[#allocation5 + $0x1c8] sm:$0xff]
    %v152 = vld [vmem:[#allocation5 + $0x1d0] sm:$0xff]
    %v153 = vld [vmem:[#allocation5 + $0x1d8] sm:$0xff]
    %v154 = vld [vmem:[#allocation5 + $0x1e0] sm:$0xff]
    %v155 = vld [vmem:[#allocation5 + $0x1e8] sm:$0xff]
    %v156 = vld [vmem:[#allocation5 + $0x1f0] sm:$0xff]
    %v157 = vld [vmem:[#allocation5 + $0x1f8] sm:$0xff]
    %v158 = vld [vmem:[#allocation5 + $0x200] sm:$0xff]
    %v159 = vld [vmem:[#allocation5 + $0x208] sm:$0xff]
    %v160 = vld [vmem:[#allocation5 + $0x210] sm:$0xff]
    %v161 = vld [vmem:[#allocation5 + $0x218] sm:$0xff]
    %v162 = vld [vmem:[#allocation5 + $0x220] sm:$0xff]
    %v163 = vld [vmem:[#allocation5 + $0x228] sm:$0xff]
    %v164 = vld [vmem:[#allocation5 + $0x230] sm:$0xff]
    %v165 = vld [vmem:[#allocation5 + $0x238] sm:$0xff]
    %v166 = vld [vmem:[#allocation5 + $0x240] sm:$0xff]
    %v167 = vld [vmem:[#allocation5 + $0x248] sm:$0xff]
    %v168 = vld [vmem:[#allocation5 + $0x250] sm:$0xff]
    %v169 = vld [vmem:[#allocation5 + $0x258] sm:$0xff]
    %v170 = vld [vmem:[#allocation5 + $0x260] sm:$0xff]
    %v171 = vld [vmem:[#allocation5 + $0x268] sm:$0xff]
    %v172 = vld [vmem:[#allocation5 + $0x270] sm:$0xff]
    %v173 = vld [vmem:[#allocation5 + $0x278] sm:$0xff]
    %v174 = vld [vmem:[#allocation5 + $0x280] sm:$0xff]
    %v175 = vld [vmem:[#allocation5 + $0x288] sm:$0xff]
    %v176 = vld [vmem:[#allocation5 + $0x290] sm:$0xff]
    %v177 = vld [vmem:[#allocation5 + $0x298] sm:$0xff]
    %v178 = vld [vmem:[#allocation5 + $0x2a0] sm:$0xff]
    %v179 = vld [vmem:[#allocation5 + $0x2a8] sm:$0xff]
    %v180 = vld [vmem:[#allocation5 + $0x2b0] sm:$0xff]
    %v181 = vld [vmem:[#allocation5 + $0x2b8] sm:$0xff]
    %v182 = vld [vmem:[#allocation5 + $0x2c0] sm:$0xff]
    %v183 = vld [vmem:[#allocation5 + $0x2c8] sm:$0xff]
    %v184 = vld [vmem:[#allocation5 + $0x2d0] sm:$0xff]
    %v185 = vld [vmem:[#allocation5 + $0x2d8] sm:$0xff]
    %v186 = vld [vmem:[#allocation5 + $0x2e0] sm:$0xff]
    %v187 = vld [vmem:[#allocation5 + $0x2e8] sm:$0xff]
    %v188 = vld [vmem:[#allocation5 + $0x2f0] sm:$0xff]
    %v189 = vld [vmem:[#allocation5 + $0x2f8] sm:$0xff]
    %v190 = vld [vmem:[#allocation5 + $0x300] sm:$0xff]
    %v191 = vld [vmem:[#allocation5 + $0x308] sm:$0xff]
    %v192 = vld [vmem:[#allocation5 + $0x310] sm:$0xff]
    %v193 = vld [vmem:[#allocation5 + $0x318] sm:$0xff]
    %v194 = vld [vmem:[#allocation5 + $0x320] sm:$0xff]
    %v195 = vld [vmem:[#allocation5 + $0x328] sm:$0xff]
    %v196 = vld [vmem:[#allocation5 + $0x330] sm:$0xff]
    %v197 = vld [vmem:[#allocation5 + $0x338] sm:$0xff]
    %v198 = vld [vmem:[#allocation5 + $0x340] sm:$0xff]
    %v199 = vld [vmem:[#allocation5 + $0x348] sm:$0xff]
    %v200 = vld [vmem:[#allocation5 + $0x350] sm:$0xff]
    %v201 = vld [vmem:[#allocation5 + $0x358] sm:$0xff]
    %v202 = vld [vmem:[#allocation5 + $0x360] sm:$0xff]
    %v203 = vld [vmem:[#allocation5 + $0x368] sm:$0xff]
    %v204 = vld [vmem:[#allocation5 + $0x370] sm:$0xff]
    %v205 = vld [vmem:[#allocation5 + $0x378] sm:$0xff]
    %v206 = vld [vmem:[#allocation5 + $0x380] sm:$0xff]
    %v207 = vld [vmem:[#allocation5 + $0x388] sm:$0xff]
    %v208 = vld [vmem:[#allocation5 + $0x390] sm:$0xff]
    %v209 = vld [vmem:[#allocation5 + $0x398] sm:$0xff]
    %v210 = vld [vmem:[#allocation5 + $0x3a0] sm:$0xff]
    %v211 = vld [vmem:[#allocation5 + $0x3a8] sm:$0xff]
    %v212 = vld [vmem:[#allocation5 + $0x3b0] sm:$0xff]
    %v213 = vld [vmem:[#allocation5 + $0x3b8] sm:$0xff]
    %v214 = vld [vmem:[#allocation5 + $0x3c0] sm:$0xff]
    %v215 = vld [vmem:[#allocation5 + $0x3c8] sm:$0xff]
    %v216 = vld [vmem:[#allocation5 + $0x3d0] sm:$0xff]
    %v217 = vld [vmem:[#allocation5 + $0x3d8] sm:$0xff]
    %v218 = vld [vmem:[#allocation5 + $0x3e0] sm:$0xff]
    %v219 = vld [vmem:[#allocation5 + $0x3e8] sm:$0xff]
    %v220 = vld [vmem:[#allocation5 + $0x3f0] sm:$0xff]
    %v221 = vld [vmem:[#allocation5 + $0x3f8] sm:$0xff]
    %v222 = vld [vmem:[#allocation5 + $0x400] sm:$0xff]
    %v223 = vld [vmem:[#allocation5 + $0x408] sm:$0xff]
    %v224 = vld [vmem:[#allocation5 + $0x410] sm:$0xff]
    %v225 = vld [vmem:[#allocation5 + $0x418] sm:$0xff]
    %v226 = vld [vmem:[#allocation5 + $0x420] sm:$0xff]
    %v227 = vld [vmem:[#allocation5 + $0x428] sm:$0xff]
    %v228 = vld [vmem:[#allocation5 + $0x430] sm:$0xff]
    %v229 = vld [vmem:[#allocation5 + $0x438] sm:$0xff]
    %v230 = vld [vmem:[#allocation5 + $0x440] sm:$0xff]
    %v231 = vld [vmem:[#allocation5 + $0x448] sm:$0xff]
    %v232 = vld [vmem:[#allocation5 + $0x450] sm:$0xff]
    %v233 = vld [vmem:[#allocation5 + $0x458] sm:$0xff]
    %v234 = vld [vmem:[#allocation5 + $0x460] sm:$0xff]
    %v235 = vld [vmem:[#allocation5 + $0x468] sm:$0xff]
    %v236 = vld [vmem:[#allocation5 + $0x470] sm:$0xff]
    %v237 = vld [vmem:[#allocation5 + $0x478] sm:$0xff]
    %v238 = vld [vmem:[#allocation5 + $0x480] sm:$0xff]
    %v239 = vld [vmem:[#allocation5 + $0x488] sm:$0xff]
    %v240 = vld [vmem:[#allocation5 + $0x490] sm:$0xff]
    %v241 = vld [vmem:[#allocation5 + $0x498] sm:$0xff]
    %v242 = vld [vmem:[#allocation5 + $0x4a0] sm:$0xff]
    %v243 = vld [vmem:[#allocation5 + $0x4a8] sm:$0xff]
    %v244 = vld [vmem:[#allocation5 + $0x4b0] sm:$0xff]
    %v245 = vld [vmem:[#allocation5 + $0x4b8] sm:$0xff]
    %v246 = vld [vmem:[#allocation5 + $0x4c0] sm:$0xff]
    %v247 = vld [vmem:[#allocation5 + $0x4c8] sm:$0xff]
    %v248 = vld [vmem:[#allocation5 + $0x4d0] sm:$0xff]
    %v249 = vld [vmem:[#allocation5 + $0x4d8] sm:$0xff]
    %v250 = vld [vmem:[#allocation5 + $0x4e0] sm:$0xff]
    %v251 = vld [vmem:[#allocation5 + $0x4e8] sm:$0xff]
    %v252 = vld [vmem:[#allocation5 + $0x4f0] sm:$0xff]
    %v253 = vld [vmem:[#allocation5 + $0x4f8] sm:$0xff]
    %v254 = vld [vmem:[#allocation5 + $0x500] sm:$0xff]
    %v255 = vld [vmem:[#allocation5 + $0x508] sm:$0xff]
    %v256 = vld [vmem:[#allocation5 + $0x510] sm:$0xff]
    %v257 = vld [vmem:[#allocation5 + $0x518] sm:$0xff]
    %v258 = vld [vmem:[#allocation5 + $0x520] sm:$0xff]
    %v259 = vld [vmem:[#allocation5 + $0x528] sm:$0xff]
    %v260 = vld [vmem:[#allocation5 + $0x530] sm:$0xff]
    %v261 = vld [vmem:[#allocation5 + $0x538] sm:$0xff]
    %v262 = vld [vmem:[#allocation5 + $0x540] sm:$0xff]
    %v263 = vld [vmem:[#allocation5 + $0x548] sm:$0xff]
    %v264 = vld [vmem:[#allocation5 + $0x550] sm:$0xff]
    %v265 = vld [vmem:[#allocation5 + $0x558] sm:$0xff]
    %v266 = vld [vmem:[#allocation5 + $0x560] sm:$0xff]
    %v267 = vld [vmem:[#allocation5 + $0x568] sm:$0xff]
    %v268 = vld [vmem:[#allocation5 + $0x570] sm:$0xff]
    %v269 = vld [vmem:[#allocation5 + $0x578] sm:$0xff]
    %v270 = vld [vmem:[#allocation5 + $0x580] sm:$0xff]
    %v271 = vld [vmem:[#allocation5 + $0x588] sm:$0xff]
    %v272 = vld [vmem:[#allocation5 + $0x590] sm:$0xff]
    %v273 = vld [vmem:[#allocation5 + $0x598] sm:$0xff]
    %v274 = vld [vmem:[#allocation5 + $0x5a0] sm:$0xff]
    %v275 = vld [vmem:[#allocation5 + $0x5a8] sm:$0xff]
    %v276 = vld [vmem:[#allocation5 + $0x5b0] sm:$0xff]
    %v277 = vld [vmem:[#allocation5 + $0x5b8] sm:$0xff]
    %v278 = vld [vmem:[#allocation5 + $0x5c0] sm:$0xff]
    %v279 = vld [vmem:[#allocation5 + $0x5c8] sm:$0xff]
    %v280 = vld [vmem:[#allocation5 + $0x5d0] sm:$0xff]
    %v281 = vld [vmem:[#allocation5 + $0x5d8] sm:$0xff]
    %v282 = vld [vmem:[#allocation5 + $0x5e0] sm:$0xff]
    %v283 = vld [vmem:[#allocation5 + $0x5e8] sm:$0xff]
    %v284 = vld [vmem:[#allocation5 + $0x5f0] sm:$0xff]
    %v285 = vld [vmem:[#allocation5 + $0x5f8] sm:$0xff]
    %v286 = vld [vmem:[#allocation5 + $0x600] sm:$0xff]
    %v287 = vld [vmem:[#allocation5 + $0x608] sm:$0xff]
    %v288 = vld [vmem:[#allocation5 + $0x610] sm:$0xff]
    %v289 = vld [vmem:[#allocation5 + $0x618] sm:$0xff]
    %v290 = vld [vmem:[#allocation5 + $0x620] sm:$0xff]
    %v291 = vld [vmem:[#allocation5 + $0x628] sm:$0xff]
    %v292 = vld [vmem:[#allocation5 + $0x630] sm:$0xff]
    %v293 = vld [vmem:[#allocation5 + $0x638] sm:$0xff]
    %v294 = vld [vmem:[#allocation5 + $0x640] sm:$0xff]
    %v295 = vld [vmem:[#allocation5 + $0x648] sm:$0xff]
    %v296 = vld [vmem:[#allocation5 + $0x650] sm:$0xff]
    %v297 = vld [vmem:[#allocation5 + $0x658] sm:$0xff]
    %v298 = vld [vmem:[#allocation5 + $0x660] sm:$0xff]
    %v299 = vld [vmem:[#allocation5 + $0x668] sm:$0xff]
    %v300 = vld [vmem:[#allocation5 + $0x670] sm:$0xff]
    %v301 = vld [vmem:[#allocation5 + $0x678] sm:$0xff]
    %v302 = vld [vmem:[#allocation5 + $0x680] sm:$0xff]
    %v303 = vld [vmem:[#allocation5 + $0x688] sm:$0xff]
    %v304 = vld [vmem:[#allocation5 + $0x690] sm:$0xff]
    %v305 = vld [vmem:[#allocation5 + $0x698] sm:$0xff]
    %v306 = vld [vmem:[#allocation5 + $0x6a0] sm:$0xff]
    %v307 = vld [vmem:[#allocation5 + $0x6a8] sm:$0xff]
    %v308 = vld [vmem:[#allocation5 + $0x6b0] sm:$0xff]
    %v309 = vld [vmem:[#allocation5 + $0x6b8] sm:$0xff]
    %v310 = vld [vmem:[#allocation5 + $0x6c0] sm:$0xff]
    %v311 = vld [vmem:[#allocation5 + $0x6c8] sm:$0xff]
    %v312 = vld [vmem:[#allocation5 + $0x6d0] sm:$0xff]
    %v313 = vld [vmem:[#allocation5 + $0x6d8] sm:$0xff]
    %v314 = vld [vmem:[#allocation5 + $0x6e0] sm:$0xff]
    %v315 = vld [vmem:[#allocation5 + $0x6e8] sm:$0xff]
    %v316 = vld [vmem:[#allocation5 + $0x6f0] sm:$0xff]
    %v317 = vld [vmem:[#allocation5 + $0x6f8] sm:$0xff]
    %v318 = vld [vmem:[#allocation5 + $0x700] sm:$0xff]
    %v319 = vld [vmem:[#allocation5 + $0x708] sm:$0xff]
    %v320 = vld [vmem:[#allocation5 + $0x710] sm:$0xff]
    %v321 = vld [vmem:[#allocation5 + $0x718] sm:$0xff]
    %v322 = vld [vmem:[#allocation5 + $0x720] sm:$0xff]
    %v323 = vld [vmem:[#allocation5 + $0x728] sm:$0xff]
    %v324 = vld [vmem:[#allocation5 + $0x730] sm:$0xff]
    %v325 = vld [vmem:[#allocation5 + $0x738] sm:$0xff]
    %v326 = vld [vmem:[#allocation5 + $0x740] sm:$0xff]
    %v327 = vld [vmem:[#allocation5 + $0x748] sm:$0xff]
    %v328 = vld [vmem:[#allocation5 + $0x750] sm:$0xff]
    %v329 = vld [vmem:[#allocation5 + $0x758] sm:$0xff]
    %v330 = vld [vmem:[#allocation5 + $0x760] sm:$0xff]
    %v331 = vld [vmem:[#allocation5 + $0x768] sm:$0xff]
    %v332 = vld [vmem:[#allocation5 + $0x770] sm:$0xff]
    %v333 = vld [vmem:[#allocation5 + $0x778] sm:$0xff]
    %v334 = vld [vmem:[#allocation5 + $0x780] sm:$0xff]
    %v335 = vld [vmem:[#allocation5 + $0x788] sm:$0xff]
    %v336 = vld [vmem:[#allocation5 + $0x790] sm:$0xff]
    %v337 = vld [vmem:[#allocation5 + $0x798] sm:$0xff]
    %v338 = vld [vmem:[#allocation5 + $0x7a0] sm:$0xff]
    %v339 = vld [vmem:[#allocation5 + $0x7a8] sm:$0xff]
    %v340 = vld [vmem:[#allocation5 + $0x7b0] sm:$0xff]
    %v341 = vld [vmem:[#allocation5 + $0x7b8] sm:$0xff]
    %v342 = vld [vmem:[#allocation5 + $0x7c0] sm:$0xff]
    %v343 = vld [vmem:[#allocation5 + $0x7c8] sm:$0xff]
    %v344 = vld [vmem:[#allocation5 + $0x7d0] sm:$0xff]
    %v345 = vld [vmem:[#allocation5 + $0x7d8] sm:$0xff]
    %v346 = vld [vmem:[#allocation5 + $0x7e0] sm:$0xff]
    %v347 = vld [vmem:[#allocation5 + $0x7e8] sm:$0xff]
    %v348 = vld [vmem:[#allocation5 + $0x7f0] sm:$0xff]
    %v349 = vld [vmem:[#allocation5 + $0x7f8] sm:$0xff]
    %v350 = vld [vmem:[%s2] sm:$0xf]
    %v352 = vlaneseq
    %v353 = vshrl.u32 %v352, 7
    %v354 = vsub.s32 0, %v353
    %v355 = vrot.slane %v350, %v354
    %v356 = vlaneseq
    %v357 = vshrl.u32 %v356, 7
    %v358 = vsub.s32 1, %v357
    %v359 = vrot.slane %v350, %v358
    %v360 = vlaneseq
    %v361 = vshrl.u32 %v360, 7
    %v362 = vsub.s32 2, %v361
    %v363 = vrot.slane %v350, %v362
    %v364 = vlaneseq
    %v365 = vshrl.u32 %v364, 7
    %v366 = vsub.s32 3, %v365
    %v367 = vrot.slane %v350, %v366
    %v373 = vcombine.high %v93, %v93
    %v375 = vunpack.c.l.s4 1983009808
    %v376 = vunpack.c.0.s8 %v375
    %v377 = vlaneseq
    %v378 = vshrl.u32 %v377, 7
    %v379 = vsub.s32 %v376, %v378
    %v380 = vrot.slane %v93, %v379
    %v382 = vunpack.c.l.s4 1983009808
    %v383 = vunpack.c.0.s8 %v382
    %v384 = vlaneseq
    %v385 = vshrl.u32 %v384, 7
    %v386 = vsub.s32 %v383, %v385
    %v387 = vrot.slane %v373, %v386
    %v388 = vcombine.high %v380, %v380
    %v389 = vcombine.high %v387, %v387
    %394 = vmatprep.subr.mxu0 %v95
    %395 = vmatpush1.msra.mxu0 %v94
    %396 = vmatprep.subr.mxu0 %v99
    %397 = vmatpush1.msra.mxu0 %v98
    %398 = vmatprep.subr.mxu0 %v103
    %399 = vmatpush1.msra.mxu0 %v102
    %400 = vmatprep.subr.mxu0 %v107
    %401 = vmatpush1.msra.mxu0 %v106
    %402 = vmatprep.subr.mxu0 %v111
    %403 = vmatpush1.msra.mxu0 %v110
    %404 = vmatprep.subr.mxu0 %v115
    %405 = vmatpush1.msra.mxu0 %v114
    %406 = vmatprep.subr.mxu0 %v119
    %407 = vmatpush1.msra.mxu0 %v118
    %408 = vmatprep.subr.mxu0 %v123
    %409 = vmatpush1.msra.mxu0 %v122
    %410 = vmatprep.subr.mxu0 %v127
    %411 = vmatpush1.msra.mxu0 %v126
    %412 = vmatprep.subr.mxu0 %v131
    %413 = vmatpush1.msra.mxu0 %v130
    %414 = vmatprep.subr.mxu0 %v135
    %415 = vmatpush1.msra.mxu0 %v134
    %416 = vmatprep.subr.mxu0 %v139
    %417 = vmatpush1.msra.mxu0 %v138
    %418 = vmatprep.subr.mxu0 %v143
    %419 = vmatpush1.msra.mxu0 %v142
    %420 = vmatprep.subr.mxu0 %v147
    %421 = vmatpush1.msra.mxu0 %v146
    %422 = vmatprep.subr.mxu0 %v151
    %423 = vmatpush1.msra.mxu0 %v150
    %424 = vmatprep.subr.mxu0 %v155
    %425 = vmatpush1.msra.mxu0 %v154
    %426 = vmatprep.subr.mxu0 %v159
    %427 = vmatpush1.msra.mxu0 %v158
    %428 = vmatprep.subr.mxu0 %v163
    %429 = vmatpush1.msra.mxu0 %v162
    %430 = vmatprep.subr.mxu0 %v167
    %431 = vmatpush1.msra.mxu0 %v166
    %432 = vmatprep.subr.mxu0 %v171
    %433 = vmatpush1.msra.mxu0 %v170
    %434 = vmatprep.subr.mxu0 %v175
    %435 = vmatpush1.msra.mxu0 %v174
    %436 = vmatprep.subr.mxu0 %v179
    %437 = vmatpush1.msra.mxu0 %v178
    %438 = vmatprep.subr.mxu0 %v183
    %439 = vmatpush1.msra.mxu0 %v182
    %440 = vmatprep.subr.mxu0 %v187
    %441 = vmatpush1.msra.mxu0 %v186
    %442 = vmatprep.subr.mxu0 %v191
    %443 = vmatpush1.msra.mxu0 %v190
    %444 = vmatprep.subr.mxu0 %v195
    %445 = vmatpush1.msra.mxu0 %v194
    %446 = vmatprep.subr.mxu0 %v199
    %447 = vmatpush1.msra.mxu0 %v198
    %448 = vmatprep.subr.mxu0 %v203
    %449 = vmatpush1.msra.mxu0 %v202
    %450 = vmatprep.subr.mxu0 %v207
    %451 = vmatpush1.msra.mxu0 %v206
    %452 = vmatprep.subr.mxu0 %v211
    %453 = vmatpush1.msra.mxu0 %v210
    %454 = vmatprep.subr.mxu0 %v215
    %455 = vmatpush1.msra.mxu0 %v214
    %456 = vmatprep.subr.mxu0 %v219
    %457 = vmatpush1.msra.mxu0 %v218
    %458 = vmatprep.mubr.f32.mxu0 %v388
    %459 = vmatmul.mubr.f32.gmra.mrb[0].mxu0 %v380
    %v460 = vpop.f32.mrb[0].mxu0
    %v461 = vadd.f32 %v355, %v460
    %v462 = vpop.f32.mrb[0].mxu0
    %v463 = vadd.f32 %v359, %v462
    %464 = vdwg.mxu0
    %465 = vmatprep.subr.mxu0 %v223
    %466 = vmatpush1.msra.mxu0 %v222
    %467 = vmatprep.subr.mxu0 %v227
    %468 = vmatpush1.msra.mxu0 %v226
    %469 = vmatprep.subr.mxu0 %v231
    %470 = vmatpush1.msra.mxu0 %v230
    %471 = vmatprep.subr.mxu0 %v235
    %472 = vmatpush1.msra.mxu0 %v234
    %473 = vmatprep.subr.mxu0 %v239
    %474 = vmatpush1.msra.mxu0 %v238
    %475 = vmatprep.subr.mxu0 %v243
    %476 = vmatpush1.msra.mxu0 %v242
    %477 = vmatprep.subr.mxu0 %v247
    %478 = vmatpush1.msra.mxu0 %v246
    %479 = vmatprep.subr.mxu0 %v251
    %480 = vmatpush1.msra.mxu0 %v250
    %481 = vmatprep.subr.mxu0 %v255
    %482 = vmatpush1.msra.mxu0 %v254
    %483 = vmatprep.subr.mxu0 %v259
    %484 = vmatpush1.msra.mxu0 %v258
    %485 = vmatprep.subr.mxu0 %v263
    %486 = vmatpush1.msra.mxu0 %v262
    %487 = vmatprep.subr.mxu0 %v267
    %488 = vmatpush1.msra.mxu0 %v266
    %489 = vmatprep.subr.mxu0 %v271
    %490 = vmatpush1.msra.mxu0 %v270
    %491 = vmatprep.subr.mxu0 %v275
    %492 = vmatpush1.msra.mxu0 %v274
    %493 = vmatprep.subr.mxu0 %v279
    %494 = vmatpush1.msra.mxu0 %v278
    %495 = vmatprep.subr.mxu0 %v283
    %496 = vmatpush1.msra.mxu0 %v282
    %497 = vmatprep.subr.mxu0 %v287
    %498 = vmatpush1.msra.mxu0 %v286
    %499 = vmatprep.subr.mxu0 %v291
    %500 = vmatpush1.msra.mxu0 %v290
    %501 = vmatprep.subr.mxu0 %v295
    %502 = vmatpush1.msra.mxu0 %v294
    %503 = vmatprep.subr.mxu0 %v299
    %504 = vmatpush1.msra.mxu0 %v298
    %505 = vmatprep.subr.mxu0 %v303
    %506 = vmatpush1.msra.mxu0 %v302
    %507 = vmatprep.subr.mxu0 %v307
    %508 = vmatpush1.msra.mxu0 %v306
    %509 = vmatprep.subr.mxu0 %v311
    %510 = vmatpush1.msra.mxu0 %v310
    %511 = vmatprep.subr.mxu0 %v315
    %512 = vmatpush1.msra.mxu0 %v314
    %513 = vmatprep.subr.mxu0 %v319
    %514 = vmatpush1.msra.mxu0 %v318
    %515 = vmatprep.subr.mxu0 %v323
    %516 = vmatpush1.msra.mxu0 %v322
    %517 = vmatprep.subr.mxu0 %v327
    %518 = vmatpush1.msra.mxu0 %v326
    %519 = vmatprep.subr.mxu0 %v331
    %520 = vmatpush1.msra.mxu0 %v330
    %521 = vmatprep.subr.mxu0 %v335
    %522 = vmatpush1.msra.mxu0 %v334
    %523 = vmatprep.subr.mxu0 %v339
    %524 = vmatpush1.msra.mxu0 %v338
    %525 = vmatprep.subr.mxu0 %v343
    %526 = vmatpush1.msra.mxu0 %v342
    %527 = vmatprep.subr.mxu0 %v347
    %528 = vmatpush1.msra.mxu0 %v346
    %529 = vmatprep.mubr.f32.mxu0 %v389
    %530 = vmatmul.mubr.f32.gmra.mrb[0].mxu0 %v387
    %v531 = vpop.f32.mrb[0].mxu0
    %v532 = vadd.f32 %v461, %v531
    %v533 = vpop.f32.mrb[0].mxu0
    %v534 = vadd.f32 %v463, %v533
    %535 = vdwg.mxu0
    %536 = vmatprep.subr.mxu0 %v97
    %537 = vmatpush1.msra.mxu0 %v96
    %538 = vmatprep.subr.mxu0 %v101
    %539 = vmatpush1.msra.mxu0 %v100
    %540 = vmatprep.subr.mxu0 %v105
    %541 = vmatpush1.msra.mxu0 %v104
    %542 = vmatprep.subr.mxu0 %v109
    %543 = vmatpush1.msra.mxu0 %v108
    %544 = vmatprep.subr.mxu0 %v113
    %545 = vmatpush1.msra.mxu0 %v112
    %546 = vmatprep.subr.mxu0 %v117
    %547 = vmatpush1.msra.mxu0 %v116
    %548 = vmatprep.subr.mxu0 %v121
    %549 = vmatpush1.msra.mxu0 %v120
    %550 = vmatprep.subr.mxu0 %v125
    %551 = vmatpush1.msra.mxu0 %v124
    %552 = vmatprep.subr.mxu0 %v129
    %553 = vmatpush1.msra.mxu0 %v128
    %554 = vmatprep.subr.mxu0 %v133
    %555 = vmatpush1.msra.mxu0 %v132
    %556 = vmatprep.subr.mxu0 %v137
    %557 = vmatpush1.msra.mxu0 %v136
    %558 = vmatprep.subr.mxu0 %v141
    %559 = vmatpush1.msra.mxu0 %v140
    %560 = vmatprep.subr.mxu0 %v145
    %561 = vmatpush1.msra.mxu0 %v144
    %562 = vmatprep.subr.mxu0 %v149
    %563 = vmatpush1.msra.mxu0 %v148
    %564 = vmatprep.subr.mxu0 %v153
    %565 = vmatpush1.msra.mxu0 %v152
    %566 = vmatprep.subr.mxu0 %v157
    %567 = vmatpush1.msra.mxu0 %v156
    %568 = vmatprep.subr.mxu0 %v161
    %569 = vmatpush1.msra.mxu0 %v160
    %570 = vmatprep.subr.mxu0 %v165
    %571 = vmatpush1.msra.mxu0 %v164
    %572 = vmatprep.subr.mxu0 %v169
    %573 = vmatpush1.msra.mxu0 %v168
    %574 = vmatprep.subr.mxu0 %v173
    %575 = vmatpush1.msra.mxu0 %v172
    %576 = vmatprep.subr.mxu0 %v177
    %577 = vmatpush1.msra.mxu0 %v176
    %578 = vmatprep.subr.mxu0 %v181
    %579 = vmatpush1.msra.mxu0 %v180
    %580 = vmatprep.subr.mxu0 %v185
    %581 = vmatpush1.msra.mxu0 %v184
    %582 = vmatprep.subr.mxu0 %v189
    %583 = vmatpush1.msra.mxu0 %v188
    %584 = vmatprep.subr.mxu0 %v193
    %585 = vmatpush1.msra.mxu0 %v192
    %586 = vmatprep.subr.mxu0 %v197
    %587 = vmatpush1.msra.mxu0 %v196
    %588 = vmatprep.subr.mxu0 %v201
    %589 = vmatpush1.msra.mxu0 %v200
    %590 = vmatprep.subr.mxu0 %v205
    %591 = vmatpush1.msra.mxu0 %v204
    %592 = vmatprep.subr.mxu0 %v209
    %593 = vmatpush1.msra.mxu0 %v208
    %594 = vmatprep.subr.mxu0 %v213
    %595 = vmatpush1.msra.mxu0 %v212
    %596 = vmatprep.subr.mxu0 %v217
    %597 = vmatpush1.msra.mxu0 %v216
    %598 = vmatprep.subr.mxu0 %v221
    %599 = vmatpush1.msra.mxu0 %v220
    %600 = vmatprep.mubr.f32.mxu0 %v388
    %601 = vmatmul.mubr.f32.gmra.mrb[0].mxu0 %v380
    %v602 = vpop.f32.mrb[0].mxu0
    %v603 = vadd.f32 %v363, %v602
    %v604 = vpop.f32.mrb[0].mxu0
    %v605 = vadd.f32 %v367, %v604
    %606 = vdwg.mxu0
    %607 = vmatprep.subr.mxu0 %v225
    %608 = vmatpush1.msra.mxu0 %v224
    %609 = vmatprep.subr.mxu0 %v229
    %610 = vmatpush1.msra.mxu0 %v228
    %611 = vmatprep.subr.mxu0 %v233
    %612 = vmatpush1.msra.mxu0 %v232
    %613 = vmatprep.subr.mxu0 %v237
    %614 = vmatpush1.msra.mxu0 %v236
    %615 = vmatprep.subr.mxu0 %v241
    %616 = vmatpush1.msra.mxu0 %v240
    %617 = vmatprep.subr.mxu0 %v245
    %618 = vmatpush1.msra.mxu0 %v244
    %619 = vmatprep.subr.mxu0 %v249
    %620 = vmatpush1.msra.mxu0 %v248
    %621 = vmatprep.subr.mxu0 %v253
    %622 = vmatpush1.msra.mxu0 %v252
    %623 = vmatprep.subr.mxu0 %v257
    %624 = vmatpush1.msra.mxu0 %v256
    %625 = vmatprep.subr.mxu0 %v261
    %626 = vmatpush1.msra.mxu0 %v260
    %627 = vmatprep.subr.mxu0 %v265
    %628 = vmatpush1.msra.mxu0 %v264
    %629 = vmatprep.subr.mxu0 %v269
    %630 = vmatpush1.msra.mxu0 %v268
    %631 = vmatprep.subr.mxu0 %v273
    %632 = vmatpush1.msra.mxu0 %v272
    %633 = vmatprep.subr.mxu0 %v277
    %634 = vmatpush1.msra.mxu0 %v276
    %635 = vmatprep.subr.mxu0 %v281
    %636 = vmatpush1.msra.mxu0 %v280
    %637 = vmatprep.subr.mxu0 %v285
    %638 = vmatpush1.msra.mxu0 %v284
    %639 = vmatprep.subr.mxu0 %v289
    %640 = vmatpush1.msra.mxu0 %v288
    %641 = vmatprep.subr.mxu0 %v293
    %642 = vmatpush1.msra.mxu0 %v292
    %643 = vmatprep.subr.mxu0 %v297
    %644 = vmatpush1.msra.mxu0 %v296
    %645 = vmatprep.subr.mxu0 %v301
    %646 = vmatpush1.msra.mxu0 %v300
    %647 = vmatprep.subr.mxu0 %v305
    %648 = vmatpush1.msra.mxu0 %v304
    %649 = vmatprep.subr.mxu0 %v309
    %650 = vmatpush1.msra.mxu0 %v308
    %651 = vmatprep.subr.mxu0 %v313
    %652 = vmatpush1.msra.mxu0 %v312
    %653 = vmatprep.subr.mxu0 %v317
    %654 = vmatpush1.msra.mxu0 %v316
    %655 = vmatprep.subr.mxu0 %v321
    %656 = vmatpush1.msra.mxu0 %v320
    %657 = vmatprep.subr.mxu0 %v325
    %658 = vmatpush1.msra.mxu0 %v324
    %659 = vmatprep.subr.mxu0 %v329
    %660 = vmatpush1.msra.mxu0 %v328
    %661 = vmatprep.subr.mxu0 %v333
    %662 = vmatpush1.msra.mxu0 %v332
    %663 = vmatprep.subr.mxu0 %v337
    %664 = vmatpush1.msra.mxu0 %v336
    %665 = vmatprep.subr.mxu0 %v341
    %666 = vmatpush1.msra.mxu0 %v340
    %667 = vmatprep.subr.mxu0 %v345
    %668 = vmatpush1.msra.mxu0 %v344
    %669 = vmatprep.subr.mxu0 %v349
    %670 = vmatpush1.msra.mxu0 %v348
    %671 = vmatprep.mubr.f32.mxu0 %v389
    %672 = vmatmul.mubr.f32.gmra.mrb[0].mxu0 %v387
    %v673 = vpop.f32.mrb[0].mxu0
    %v674 = vadd.f32 %v603, %v673
    %v675 = vpop.f32.mrb[0].mxu0
    %v676 = vadd.f32 %v605, %v675
    %677 = vdwg.mxu0
    %v678 = vmax.f32 %v532, 0.0
    %v679 = vmax.f32 %v534, 0.0
    %v680 = vmax.f32 %v674, 0.0
    %v681 = vmax.f32 %v676, 0.0
    %v682 = vld [vmem:[#allocation7] sm:$0xff]
    %v683 = vld [vmem:[#allocation7 + $0x8] sm:$0xff]
    %v684 = vld [vmem:[#allocation7 + $0x10] sm:$0xff]
    %v685 = vld [vmem:[#allocation7 + $0x18] sm:$0xff]
    %v686 = vld [vmem:[#allocation7 + $0x20] sm:$0xff]
    %v687 = vld [vmem:[#allocation7 + $0x28] sm:$0xff]
    %v688 = vld [vmem:[#allocation7 + $0x30] sm:$0xff]
    %v689 = vld [vmem:[#allocation7 + $0x38] sm:$0xff]
    %v690 = vld [vmem:[#allocation7 + $0x40] sm:$0xff]
    %v691 = vld [vmem:[#allocation7 + $0x48] sm:$0xff]
    %v692 = vld [vmem:[#allocation7 + $0x50] sm:$0xff]
    %v693 = vld [vmem:[#allocation7 + $0x58] sm:$0xff]
    %v694 = vld [vmem:[#allocation7 + $0x60] sm:$0xff]
    %v695 = vld [vmem:[#allocation7 + $0x68] sm:$0xff]
    %v696 = vld [vmem:[#allocation7 + $0x70] sm:$0xff]
    %v697 = vld [vmem:[#allocation7 + $0x78] sm:$0xff]
    %v698 = vld [vmem:[#allocation7 + $0x80] sm:$0xff]
    %v699 = vld [vmem:[#allocation7 + $0x88] sm:$0xff]
    %v700 = vld [vmem:[#allocation7 + $0x90] sm:$0xff]
    %v701 = vld [vmem:[#allocation7 + $0x98] sm:$0xff]
    %v702 = vld [vmem:[#allocation7 + $0xa0] sm:$0xff]
    %v703 = vld [vmem:[#allocation7 + $0xa8] sm:$0xff]
    %v704 = vld [vmem:[#allocation7 + $0xb0] sm:$0xff]
    %v705 = vld [vmem:[#allocation7 + $0xb8] sm:$0xff]
    %v706 = vld [vmem:[#allocation7 + $0xc0] sm:$0xff]
    %v707 = vld [vmem:[#allocation7 + $0xc8] sm:$0xff]
    %v708 = vld [vmem:[#allocation7 + $0xd0] sm:$0xff]
    %v709 = vld [vmem:[#allocation7 + $0xd8] sm:$0xff]
    %v710 = vld [vmem:[#allocation7 + $0xe0] sm:$0xff]
    %v711 = vld [vmem:[#allocation7 + $0xe8] sm:$0xff]
    %v712 = vld [vmem:[#allocation7 + $0xf0] sm:$0xff]
    %v713 = vld [vmem:[#allocation7 + $0xf8] sm:$0xff]
    %v714 = vld [vmem:[#allocation7 + $0x100] sm:$0xff]
    %v715 = vld [vmem:[#allocation7 + $0x108] sm:$0xff]
    %v716 = vld [vmem:[#allocation7 + $0x110] sm:$0xff]
    %v717 = vld [vmem:[#allocation7 + $0x118] sm:$0xff]
    %v718 = vld [vmem:[#allocation7 + $0x120] sm:$0xff]
    %v719 = vld [vmem:[#allocation7 + $0x128] sm:$0xff]
    %v720 = vld [vmem:[#allocation7 + $0x130] sm:$0xff]
    %v721 = vld [vmem:[#allocation7 + $0x138] sm:$0xff]
    %v722 = vld [vmem:[#allocation7 + $0x140] sm:$0xff]
    %v723 = vld [vmem:[#allocation7 + $0x148] sm:$0xff]
    %v724 = vld [vmem:[#allocation7 + $0x150] sm:$0xff]
    %v725 = vld [vmem:[#allocation7 + $0x158] sm:$0xff]
    %v726 = vld [vmem:[#allocation7 + $0x160] sm:$0xff]
    %v727 = vld [vmem:[#allocation7 + $0x168] sm:$0xff]
    %v728 = vld [vmem:[#allocation7 + $0x170] sm:$0xff]
    %v729 = vld [vmem:[#allocation7 + $0x178] sm:$0xff]
    %v730 = vld [vmem:[#allocation7 + $0x180] sm:$0xff]
    %v731 = vld [vmem:[#allocation7 + $0x188] sm:$0xff]
    %v732 = vld [vmem:[#allocation7 + $0x190] sm:$0xff]
    %v733 = vld [vmem:[#allocation7 + $0x198] sm:$0xff]
    %v734 = vld [vmem:[#allocation7 + $0x1a0] sm:$0xff]
    %v735 = vld [vmem:[#allocation7 + $0x1a8] sm:$0xff]
    %v736 = vld [vmem:[#allocation7 + $0x1b0] sm:$0xff]
    %v737 = vld [vmem:[#allocation7 + $0x1b8] sm:$0xff]
    %v738 = vld [vmem:[#allocation7 + $0x1c0] sm:$0xff]
    %v739 = vld [vmem:[#allocation7 + $0x1c8] sm:$0xff]
    %v740 = vld [vmem:[#allocation7 + $0x1d0] sm:$0xff]
    %v741 = vld [vmem:[#allocation7 + $0x1d8] sm:$0xff]
    %v742 = vld [vmem:[#allocation7 + $0x1e0] sm:$0xff]
    %v743 = vld [vmem:[#allocation7 + $0x1e8] sm:$0xff]
    %v744 = vld [vmem:[#allocation7 + $0x1f0] sm:$0xff]
    %v745 = vld [vmem:[#allocation7 + $0x1f8] sm:$0xff]
    %v746 = vld [vmem:[%s4] sm:$0x1]
    %v748 = vlaneseq
    %v749 = vshrl.u32 %v748, 7
    %v750 = vsub.s32 0, %v749
    %v751 = vrot.slane %v746, %v750
    %753 = vmatprep.subr.mxu0 0.0
    %754 = vmatpush1.msra.mxu0 %v682
    %755 = vmatprep.subr.mxu0 0.0
    %756 = vmatpush1.msra.mxu0 %v683
    %757 = vmatprep.subr.mxu0 0.0
    %758 = vmatpush1.msra.mxu0 %v684
    %759 = vmatprep.subr.mxu0 0.0
    %760 = vmatpush1.msra.mxu0 %v685
    %761 = vmatprep.subr.mxu0 0.0
    %762 = vmatpush1.msra.mxu0 %v686
    %763 = vmatprep.subr.mxu0 0.0
    %764 = vmatpush1.msra.mxu0 %v687
    %765 = vmatprep.subr.mxu0 0.0
    %766 = vmatpush1.msra.mxu0 %v688
    %767 = vmatprep.subr.mxu0 0.0
    %768 = vmatpush1.msra.mxu0 %v689
    %769 = vmatprep.subr.mxu0 0.0
    %770 = vmatpush1.msra.mxu0 %v690
    %771 = vmatprep.subr.mxu0 0.0
    %772 = vmatpush1.msra.mxu0 %v691
    %773 = vmatprep.subr.mxu0 0.0
    %774 = vmatpush1.msra.mxu0 %v692
    %775 = vmatprep.subr.mxu0 0.0
    %776 = vmatpush1.msra.mxu0 %v693
    %777 = vmatprep.subr.mxu0 0.0
    %778 = vmatpush1.msra.mxu0 %v694
    %779 = vmatprep.subr.mxu0 0.0
    %780 = vmatpush1.msra.mxu0 %v695
    %781 = vmatprep.subr.mxu0 0.0
    %782 = vmatpush1.msra.mxu0 %v696
    %783 = vmatprep.subr.mxu0 0.0
    %784 = vmatpush1.msra.mxu0 %v697
    %785 = vmatprep.subr.mxu0 0.0
    %786 = vmatpush1.msra.mxu0 %v698
    %787 = vmatprep.subr.mxu0 0.0
    %788 = vmatpush1.msra.mxu0 %v699
    %789 = vmatprep.subr.mxu0 0.0
    %790 = vmatpush1.msra.mxu0 %v700
    %791 = vmatprep.subr.mxu0 0.0
    %792 = vmatpush1.msra.mxu0 %v701
    %793 = vmatprep.subr.mxu0 0.0
    %794 = vmatpush1.msra.mxu0 %v702
    %795 = vmatprep.subr.mxu0 0.0
    %796 = vmatpush1.msra.mxu0 %v703
    %797 = vmatprep.subr.mxu0 0.0
    %798 = vmatpush1.msra.mxu0 %v704
    %799 = vmatprep.subr.mxu0 0.0
    %800 = vmatpush1.msra.mxu0 %v705
    %801 = vmatprep.subr.mxu0 0.0
    %802 = vmatpush1.msra.mxu0 %v706
    %803 = vmatprep.subr.mxu0 0.0
    %804 = vmatpush1.msra.mxu0 %v707
    %805 = vmatprep.subr.mxu0 0.0
    %806 = vmatpush1.msra.mxu0 %v708
    %807 = vmatprep.subr.mxu0 0.0
    %808 = vmatpush1.msra.mxu0 %v709
    %809 = vmatprep.subr.mxu0 0.0
    %810 = vmatpush1.msra.mxu0 %v710
    %811 = vmatprep.subr.mxu0 0.0
    %812 = vmatpush1.msra.mxu0 %v711
    %813 = vmatprep.subr.mxu0 0.0
    %814 = vmatpush1.msra.mxu0 %v712
    %815 = vmatprep.subr.mxu0 0.0
    %816 = vmatpush1.msra.mxu0 %v713
    %817 = vmatprep.mubr.f32.mxu0 %v679
    %818 = vmatmul.mubr.f32.gmra.mrb[0].mxu0 %v678
    %v819 = vpop.f32.mrb[0].mxu0
    %v820 = vadd.f32 %v751, %v819
    %v821 = vpop.f32.mrb[0].mxu0
    %822 = vdwg.mxu0
    %823 = vmatprep.subr.mxu0 0.0
    %824 = vmatpush1.msra.mxu0 %v714
    %825 = vmatprep.subr.mxu0 0.0
    %826 = vmatpush1.msra.mxu0 %v715
    %827 = vmatprep.subr.mxu0 0.0
    %828 = vmatpush1.msra.mxu0 %v716
    %829 = vmatprep.subr.mxu0 0.0
    %830 = vmatpush1.msra.mxu0 %v717
    %831 = vmatprep.subr.mxu0 0.0
    %832 = vmatpush1.msra.mxu0 %v718
    %833 = vmatprep.subr.mxu0 0.0
    %834 = vmatpush1.msra.mxu0 %v719
    %835 = vmatprep.subr.mxu0 0.0
    %836 = vmatpush1.msra.mxu0 %v720
    %837 = vmatprep.subr.mxu0 0.0
    %838 = vmatpush1.msra.mxu0 %v721
    %839 = vmatprep.subr.mxu0 0.0
    %840 = vmatpush1.msra.mxu0 %v722
    %841 = vmatprep.subr.mxu0 0.0
    %842 = vmatpush1.msra.mxu0 %v723
    %843 = vmatprep.subr.mxu0 0.0
    %844 = vmatpush1.msra.mxu0 %v724
    %845 = vmatprep.subr.mxu0 0.0
    %846 = vmatpush1.msra.mxu0 %v725
    %847 = vmatprep.subr.mxu0 0.0
    %848 = vmatpush1.msra.mxu0 %v726
    %849 = vmatprep.subr.mxu0 0.0
    %850 = vmatpush1.msra.mxu0 %v727
    %851 = vmatprep.subr.mxu0 0.0
    %852 = vmatpush1.msra.mxu0 %v728
    %853 = vmatprep.subr.mxu0 0.0
    %854 = vmatpush1.msra.mxu0 %v729
    %855 = vmatprep.subr.mxu0 0.0
    %856 = vmatpush1.msra.mxu0 %v730
    %857 = vmatprep.subr.mxu0 0.0
    %858 = vmatpush1.msra.mxu0 %v731
    %859 = vmatprep.subr.mxu0 0.0
    %860 = vmatpush1.msra.mxu0 %v732
    %861 = vmatprep.subr.mxu0 0.0
    %862 = vmatpush1.msra.mxu0 %v733
    %863 = vmatprep.subr.mxu0 0.0
    %864 = vmatpush1.msra.mxu0 %v734
    %865 = vmatprep.subr.mxu0 0.0
    %866 = vmatpush1.msra.mxu0 %v735
    %867 = vmatprep.subr.mxu0 0.0
    %868 = vmatpush1.msra.mxu0 %v736
    %869 = vmatprep.subr.mxu0 0.0
    %870 = vmatpush1.msra.mxu0 %v737
    %871 = vmatprep.subr.mxu0 0.0
    %872 = vmatpush1.msra.mxu0 %v738
    %873 = vmatprep.subr.mxu0 0.0
    %874 = vmatpush1.msra.mxu0 %v739
    %875 = vmatprep.subr.mxu0 0.0
    %876 = vmatpush1.msra.mxu0 %v740
    %877 = vmatprep.subr.mxu0 0.0
    %878 = vmatpush1.msra.mxu0 %v741
    %879 = vmatprep.subr.mxu0 0.0
    %880 = vmatpush1.msra.mxu0 %v742
    %881 = vmatprep.subr.mxu0 0.0
    %882 = vmatpush1.msra.mxu0 %v743
    %883 = vmatprep.subr.mxu0 0.0
    %884 = vmatpush1.msra.mxu0 %v744
    %885 = vmatprep.subr.mxu0 0.0
    %886 = vmatpush1.msra.mxu0 %v745
    %887 = vmatprep.mubr.f32.mxu0 %v681
    %888 = vmatmul.mubr.f32.gmra.mrb[0].mxu0 %v680
    %v889 = vpop.f32.mrb[0].mxu0
    %v890 = vadd.f32 %v820, %v889
    %v891 = vpop.f32.mrb[0].mxu0
    %892 = vdwg.mxu0
    %v893 = vmul.f32 %v890, %v890
    %v894 = vld [vmem:[#allocation8] sm:$0xff]
    %v895 = vld [vmem:[#allocation8 + $0x8] sm:$0xff]
    %v896 = vld [vmem:[#allocation8 + $0x10] sm:$0xff]
    %v897 = vld [vmem:[#allocation8 + $0x18] sm:$0xff]
    %v898 = vld [vmem:[#allocation8 + $0x20] sm:$0xff]
    %v899 = vld [vmem:[#allocation8 + $0x28] sm:$0xff]
    %v900 = vld [vmem:[#allocation8 + $0x30] sm:$0xff]
    %v901 = vld [vmem:[#allocation8 + $0x38] sm:$0xff]
    %v902 = vld [vmem:[#allocation8 + $0x40] sm:$0xff]
    %v903 = vld [vmem:[#allocation8 + $0x48] sm:$0xff]
    %v904 = vld [vmem:[#allocation8 + $0x50] sm:$0xff]
    %v905 = vld [vmem:[#allocation8 + $0x58] sm:$0xff]
    %v906 = vld [vmem:[#allocation8 + $0x60] sm:$0xff]
    %v907 = vld [vmem:[#allocation8 + $0x68] sm:$0xff]
    %v908 = vld [vmem:[#allocation8 + $0x70] sm:$0xff]
    %v909 = vld [vmem:[#allocation8 + $0x78] sm:$0xff]
    %910 = vmatprep.subr.mxu0 0.0
    %911 = vmatpush1.msra.mxu0 %v894
    %912 = vmatprep.subr.mxu0 0.0
    %913 = vmatpush1.msra.mxu0 %v895
    %914 = vmatprep.subr.mxu0 0.0
    %915 = vmatpush1.msra.mxu0 %v896
    %916 = vmatprep.subr.mxu0 0.0
    %917 = vmatpush1.msra.mxu0 %v897
    %918 = vmatprep.subr.mxu0 0.0
    %919 = vmatpush1.msra.mxu0 %v898
    %920 = vmatprep.subr.mxu0 0.0
    %921 = vmatpush1.msra.mxu0 %v899
    %922 = vmatprep.subr.mxu0 0.0
    %923 = vmatpush1.msra.mxu0 %v900
    %924 = vmatprep.subr.mxu0 0.0
    %925 = vmatpush1.msra.mxu0 %v901
    %926 = vmatprep.subr.mxu0 0.0
    %927 = vmatpush1.msra.mxu0 %v902
    %928 = vmatprep.subr.mxu0 0.0
    %929 = vmatpush1.msra.mxu0 %v903
    %930 = vmatprep.subr.mxu0 0.0
    %931 = vmatpush1.msra.mxu0 %v904
    %932 = vmatprep.subr.mxu0 0.0
    %933 = vmatpush1.msra.mxu0 %v905
    %934 = vmatprep.subr.mxu0 0.0
    %935 = vmatpush1.msra.mxu0 %v906
    %936 = vmatprep.subr.mxu0 0.0
    %937 = vmatpush1.msra.mxu0 %v907
    %938 = vmatprep.subr.mxu0 0.0
    %939 = vmatpush1.msra.mxu0 %v908
    %940 = vmatprep.subr.mxu0 0.0
    %941 = vmatpush1.msra.mxu0 %v909
    %942 = vmatprep.subr.mxu0 0.0
    %943 = vmatpush1.msra.mxu0 0.0
    %944 = vmatprep.subr.mxu0 0.0
    %945 = vmatpush1.msra.mxu0 0.0
    %946 = vmatprep.subr.mxu0 0.0
    %947 = vmatpush1.msra.mxu0 0.0
    %948 = vmatprep.subr.mxu0 0.0
    %949 = vmatpush1.msra.mxu0 0.0
    %950 = vmatprep.subr.mxu0 0.0
    %951 = vmatpush1.msra.mxu0 0.0
    %952 = vmatprep.subr.mxu0 0.0
    %953 = vmatpush1.msra.mxu0 0.0
    %954 = vmatprep.subr.mxu0 0.0
    %955 = vmatpush1.msra.mxu0 0.0
    %956 = vmatprep.subr.mxu0 0.0
    %957 = vmatpush1.msra.mxu0 0.0
    %958 = vmatprep.subr.mxu0 0.0
    %959 = vmatpush1.msra.mxu0 0.0
    %960 = vmatprep.subr.mxu0 0.0
    %961 = vmatpush1.msra.mxu0 0.0
    %962 = vmatprep.subr.mxu0 0.0
    %963 = vmatpush1.msra.mxu0 0.0
    %964 = vmatprep.subr.mxu0 0.0
    %965 = vmatpush1.msra.mxu0 0.0
    %966 = vmatprep.subr.mxu0 0.0
    %967 = vmatpush1.msra.mxu0 0.0
    %968 = vmatprep.subr.mxu0 0.0
    %969 = vmatpush1.msra.mxu0 0.0
    %970 = vmatprep.subr.mxu0 0.0
    %971 = vmatpush1.msra.mxu0 0.0
    %972 = vmatprep.subr.mxu0 0.0
    %973 = vmatpush1.msra.mxu0 0.0
    %974 = vmatprep.mubr.f32.mxu0 0.0
    %975 = vmatmul.mubr.f32.gmra.mrb[0].mxu0 %v893
    %v976 = vpop.f32.mrb[0].mxu0
    %v977 = vadd.f32 0.0, %v976
    %v978 = vpop.f32.mrb[0].mxu0
    %979 = vdwg.mxu0
    %v980 = vmax.f32 %v977, 1e-24
    %v981 = vrsqrt.pop %v980
    %v982 = vld [vmem:[#allocation10] sm:$0xff]
    %v983 = vld [vmem:[#allocation10 + $0x8] sm:$0xff]
    %v984 = vld [vmem:[#allocation10 + $0x10] sm:$0xff]
    %v985 = vld [vmem:[#allocation10 + $0x18] sm:$0xff]
    %v986 = vld [vmem:[#allocation10 + $0x20] sm:$0xff]
    %v987 = vld [vmem:[#allocation10 + $0x28] sm:$0xff]
    %v988 = vld [vmem:[#allocation10 + $0x30] sm:$0xff]
    %v989 = vld [vmem:[#allocation10 + $0x38] sm:$0xff]
    %v990 = vld [vmem:[#allocation10 + $0x40] sm:$0xff]
    %v991 = vld [vmem:[#allocation10 + $0x48] sm:$0xff]
    %v992 = vld [vmem:[#allocation10 + $0x50] sm:$0xff]
    %v993 = vld [vmem:[#allocation10 + $0x58] sm:$0xff]
    %v994 = vld [vmem:[#allocation10 + $0x60] sm:$0xff]
    %v995 = vld [vmem:[#allocation10 + $0x68] sm:$0xff]
    %v996 = vld [vmem:[#allocation10 + $0x70] sm:$0xff]
    %v997 = vld [vmem:[#allocation10 + $0x78] sm:$0xff]
    %998 = vmatprep.subr.mxu0 0.0
    %999 = vmatpush1.msra.mxu0 %v982
    %1000 = vmatprep.subr.mxu0 0.0
    %1001 = vmatpush1.msra.mxu0 %v983
    %1002 = vmatprep.subr.mxu0 0.0
    %1003 = vmatpush1.msra.mxu0 %v984
    %1004 = vmatprep.subr.mxu0 0.0
    %1005 = vmatpush1.msra.mxu0 %v985
    %1006 = vmatprep.subr.mxu0 0.0
    %1007 = vmatpush1.msra.mxu0 %v986
    %1008 = vmatprep.subr.mxu0 0.0
    %1009 = vmatpush1.msra.mxu0 %v987
    %1010 = vmatprep.subr.mxu0 0.0
    %1011 = vmatpush1.msra.mxu0 %v988
    %1012 = vmatprep.subr.mxu0 0.0
    %1013 = vmatpush1.msra.mxu0 %v989
    %1014 = vmatprep.subr.mxu0 0.0
    %1015 = vmatpush1.msra.mxu0 %v990
    %1016 = vmatprep.subr.mxu0 0.0
    %1017 = vmatpush1.msra.mxu0 %v991
    %1018 = vmatprep.subr.mxu0 0.0
    %1019 = vmatpush1.msra.mxu0 %v992
    %1020 = vmatprep.subr.mxu0 0.0
    %1021 = vmatpush1.msra.mxu0 %v993
    %1022 = vmatprep.subr.mxu0 0.0
    %1023 = vmatpush1.msra.mxu0 %v994
    %1024 = vmatprep.subr.mxu0 0.0
    %1025 = vmatpush1.msra.mxu0 %v995
    %1026 = vmatprep.subr.mxu0 0.0
    %1027 = vmatpush1.msra.mxu0 %v996
    %1028 = vmatprep.subr.mxu0 0.0
    %1029 = vmatpush1.msra.mxu0 %v997
    %1030 = vmatprep.subr.mxu0 0.0
    %1031 = vmatpush1.msra.mxu0 0.0
    %1032 = vmatprep.subr.mxu0 0.0
    %1033 = vmatpush1.msra.mxu0 0.0
    %1034 = vmatprep.subr.mxu0 0.0
    %1035 = vmatpush1.msra.mxu0 0.0
    %1036 = vmatprep.subr.mxu0 0.0
    %1037 = vmatpush1.msra.mxu0 0.0
    %1038 = vmatprep.subr.mxu0 0.0
    %1039 = vmatpush1.msra.mxu0 0.0
    %1040 = vmatprep.subr.mxu0 0.0
    %1041 = vmatpush1.msra.mxu0 0.0
    %1042 = vmatprep.subr.mxu0 0.0
    %1043 = vmatpush1.msra.mxu0 0.0
    %1044 = vmatprep.subr.mxu0 0.0
    %1045 = vmatpush1.msra.mxu0 0.0
    %1046 = vmatprep.subr.mxu0 0.0
    %1047 = vmatpush1.msra.mxu0 0.0
    %1048 = vmatprep.subr.mxu0 0.0
    %1049 = vmatpush1.msra.mxu0 0.0
    %1050 = vmatprep.subr.mxu0 0.0
    %1051 = vmatpush1.msra.mxu0 0.0
    %1052 = vmatprep.subr.mxu0 0.0
    %1053 = vmatpush1.msra.mxu0 0.0
    %1054 = vmatprep.subr.mxu0 0.0
    %1055 = vmatpush1.msra.mxu0 0.0
    %1056 = vmatprep.subr.mxu0 0.0
    %1057 = vmatpush1.msra.mxu0 0.0
    %1058 = vmatprep.subr.mxu0 0.0
    %1059 = vmatpush1.msra.mxu0 0.0
    %1060 = vmatprep.subr.mxu0 0.0
    %1061 = vmatpush1.msra.mxu0 0.0
    %1062 = vmatprep.mubr.f32.mxu0 0.0
    %1063 = vmatmul.mubr.f32.gmra.mrb[0].mxu0 %v981
    %v1064 = vpop.f32.mrb[0].mxu0
    %v1065 = vadd.f32 0.0, %v1064
    %v1066 = vpop.f32.mrb[0].mxu0
    %1067 = vdwg.mxu0
    %v1068 = vlaneseq
    %v1069 = vand.u32 %v1068, 127
    %vm1070 = vcmp.ge.s32.totalorder %v1069, 8
    %vm1071 = vcmp.lt.s32.totalorder %v1069, 72
    %vm1072 = vmand %vm1070, %vm1071
    %v1073 = vmul.f32 %v890, %v1065
    %v1074 = vmax.f32 %v890, 0.0
    %v1075 = vsel %vm1072, 1, 0
    %vm1076 = vcmp.eq.s32.totalorder %v1075, 1
    %v1077 = vsel %vm1076, %v1073, %v1074
    %1078 = vst [vmem:[#allocation11] sm:$0x3] %v1077
    // Predicated region
    $region50: #{tpu_custom_call.1} parent=1 // pred_check
      _
    $region51: #{tpu_custom_call.1} parent=1 // pred_check_branch
      %1080 = sbr.rel (0) target = $region53
    $region52: #{tpu_custom_call.1} parent=1 // pred_region
      %s1082 = ssub.s32 32, 32
      %1083 = vsyncadd [#allocation4], %s1082
      %s1085 = sshll.u32 [#allocation11], 4
      %s1086 = int_to_ptr.vmem [resolvable:$true] %s1085
      %1088 = dma.vmem_to_hbm [thread:$0]  %s1086, 32, %s7, [#allocation4]
    $region53: #{tpu_custom_call.1} parent=1 // pred_fallthru
      _
    // Predicated region
    $region54: #{tpu_custom_call.1} parent=1 // pred_check
      _
    $region55: #{tpu_custom_call.1} parent=1 // pred_check_branch
      %1090 = sbr.rel (0) target = $region57
    $region56: #{tpu_custom_call.1} parent=1 // pred_region
      %1091 = dma.done [#allocation4], 32
    $region57: #{tpu_custom_call.1} parent=1 // pred_fallthru
      _
    %1092 = vsyncpa [#allocation3], 1
    %1093 = vsyncpa [#allocation6], 1
    %1094 = vsyncpa [#allocation9], 1
    %1095 = vsyncpa [#allocation4], 1

// kernel: tpu_custom_call.1
$region0: #{tpu_custom_call.1}
  #allocation0 [shape = 'u32[]', space=smem, size = 0x4, offset = 0x4, fixed_abs, tag = 'smem constant byte address 0x4 - core index']
  #allocation1 [shape = 'u32[144,128]{1,0:T(1,128)}', space=vmem, size = 0x12000, scoped, tag = 'internal scratch']
  %s0 = inlined_call_operand.hbm [shape: f32[2,512], index: 0, kind: input, shape index: {}]
  %s1 = inlined_call_operand.hbm [shape: f32[512,512], index: 1, kind: input, shape index: {}]
  %s2 = inlined_call_operand.vmem [shape: f32[1,512], index: 2, kind: input, shape index: {}]
  %s3 = inlined_call_operand.hbm [shape: f32[512,128], index: 3, kind: input, shape index: {}]
  %s4 = inlined_call_operand.vmem [shape: f32[1,128], index: 4, kind: input, shape index: {}]
  %s5 = inlined_call_operand.hbm [shape: f32[128,128], index: 5, kind: input, shape index: {}]
  %s6 = inlined_call_operand.hbm [shape: f32[128,128], index: 6, kind: input, shape index: {}]
  %s7 = inlined_call_operand.hbm [shape: f32[2,128], index: 7, kind: output, shape index: {}]
  %s8 = sld [smem:[#allocation0]]
  $region58: #{tpu_custom_call.1} parent=0
    _
  %s10 = ssub.s32 1, %s8
  %s11 = scalar_select 0, %s10, %s8
  $region1: #{tpu_custom_call.1} parent=0
    #allocation2 [shape = 'u8[4096]{0}', space=vmem, size = 0x1000, scoped, tag = 'input window, operand 0, single buffered']
    #allocation3 [shape = 's32[1]{0}', space=sflag, size = 0x4, scoped, tag = 'scoped memory for tpu_custom_call.1']
    #allocation4 [shape = 's32[1]{0}', space=sflag, size = 0x4, scoped, tag = 'scoped memory for tpu_custom_call.1']
    #allocation5 [shape = 'u8[1048576]{0}', space=vmem, size = 0x100000, scoped, tag = 'input window, operand 1, single buffered']
    #allocation6 [shape = 's32[1]{0}', space=sflag, size = 0x4, scoped, tag = 'scoped memory for tpu_custom_call.1']
    #allocation7 [shape = 'u8[262144]{0}', space=vmem, size = 0x40000, scoped, tag = 'input window, operand 3, single buffered']
    #allocation8 [shape = 'u8[65536]{0}', space=vmem, size = 0x10000, scoped, tag = 'input window, operand 5, single buffered']
    #allocation9 [shape = 's32[1]{0}', space=sflag, size = 0x4, scoped, tag = 'scoped memory for tpu_custom_call.1']
    #allocation10 [shape = 'u8[65536]{0}', space=vmem, size = 0x10000, scoped, tag = 'input window, operand 6, single buffered']
    #allocation11 [shape = 'u8[1024]{0}', space=vmem, size = 0x400, scoped, tag = 'output window, operand 0, single buffered']
    %12 = vsyncpa [#allocation3], 0
    %13 = vsyncpa [#allocation6], 0
    %14 = vsyncpa [#allocation9], 0
    %15 = vsyncpa [#allocation4], 0
    // Predicated region
    $region2: #{tpu_custom_call.1} parent=1 // pred_check
      _
    $region3: #{tpu_custom_call.1} parent=1 // pred_check_branch
      %17 = sbr.rel (0) target = $region5
    $region4: #{tpu_custom_call.1} parent=1 // pred_region
      %s19 = ssub.s32 128, 128
      %20 = vsyncadd [#allocation3], %s19
      %s22 = sshll.u32 [#allocation2], 4
      %s23 = int_to_ptr.vmem [resolvable:$true] %s22
      %25 = dma.hbm_to_vmem [thread:$0]  %s0, 128, %s23, [#allocation3]
    $region5: #{tpu_custom_call.1} parent=1 // pred_fallthru
      _
    // Predicated region
    $region6: #{tpu_custom_call.1} parent=1 // pred_check
      _
    $region7: #{tpu_custom_call.1} parent=1 // pred_check_branch
      %27 = sbr.rel (0) target = $region9
    $region8: #{tpu_custom_call.1} parent=1 // pred_region
      %s29 = ssub.s32 32768, 32768
      %30 = vsyncadd [#allocation6], %s29
      %s31 = sshll.u32 [#allocation5], 4
      %s32 = int_to_ptr.vmem [resolvable:$true] %s31
      %37 = dma.hbm_to_vmem [thread:$0]  %s1, 32768, %s32, [#allocation6], 512, 512, 32
    $region9: #{tpu_custom_call.1} parent=1 // pred_fallthru
      _
    // Predicated region
    $region10: #{tpu_custom_call.1} parent=1 // pred_check
      _
    $region11: #{tpu_custom_call.1} parent=1 // pred_check_branch
      %39 = sbr.rel (0) target = $region13
    $region12: #{tpu_custom_call.1} parent=1 // pred_region
      _
    $region13: #{tpu_custom_call.1} parent=1 // pred_fallthru
      _
    // Predicated region
    $region14: #{tpu_custom_call.1} parent=1 // pred_check
      _
    $region15: #{tpu_custom_call.1} parent=1 // pred_check_branch
      %41 = sbr.rel (0) target = $region17
    $region16: #{tpu_custom_call.1} parent=1 // pred_region
      %s43 = ssub.s32 8192, 8192
      %44 = vsyncadd [#allocation6], %s43
      %s45 = sshll.u32 [#allocation7], 4
      %s46 = int_to_ptr.vmem [resolvable:$true] %s45
      %51 = dma.hbm_to_vmem [thread:$0]  %s3, 8192, %s46, [#allocation6], 128, 128, 8
    $region17: #{tpu_custom_call.1} parent=1 // pred_fallthru
      _
    // Predicated region
    $region18: #{tpu_custom_call.1} parent=1 // pred_check
      _
    $region19: #{tpu_custom_call.1} parent=1 // pred_check_branch
      %53 = sbr.rel (0) target = $region21
    $region20: #{tpu_custom_call.1} parent=1 // pred_region
      _
    $region21: #{tpu_custom_call.1} parent=1 // pred_fallthru
      _
    // Predicated region
    $region22: #{tpu_custom_call.1} parent=1 // pred_check
      _
    $region23: #{tpu_custom_call.1} parent=1 // pred_check_branch
      %55 = sbr.rel (0) target = $region25
    $region24: #{tpu_custom_call.1} parent=1 // pred_region
      %s57 = ssub.s32 2048, 2048
      %58 = vsyncadd [#allocation9], %s57
      %s59 = sshll.u32 [#allocation8], 4
      %s60 = int_to_ptr.vmem [resolvable:$true] %s59
      %65 = dma.hbm_to_vmem [thread:$0]  %s5, 2048, %s60, [#allocation9], 128, 128, 8
    $region25: #{tpu_custom_call.1} parent=1 // pred_fallthru
      _
    // Predicated region
    $region26: #{tpu_custom_call.1} parent=1 // pred_check
      _
    $region27: #{tpu_custom_call.1} parent=1 // pred_check_branch
      %67 = sbr.rel (0) target = $region29
    $region28: #{tpu_custom_call.1} parent=1 // pred_region
      %s69 = ssub.s32 2048, 2048
      %70 = vsyncadd [#allocation9], %s69
      %s71 = sshll.u32 [#allocation10], 4
      %s72 = int_to_ptr.vmem [resolvable:$true] %s71
      %77 = dma.hbm_to_vmem [thread:$0]  %s6, 2048, %s72, [#allocation9], 128, 128, 8
    $region29: #{tpu_custom_call.1} parent=1 // pred_fallthru
      _
    // Predicated region
    $region30: #{tpu_custom_call.1} parent=1 // pred_check
      _
    $region31: #{tpu_custom_call.1} parent=1 // pred_check_branch
      %79 = sbr.rel (0) target = $region33
    $region32: #{tpu_custom_call.1} parent=1 // pred_region
      %80 = dma.done [#allocation3], 128
    $region33: #{tpu_custom_call.1} parent=1 // pred_fallthru
      _
    // Predicated region
    $region34: #{tpu_custom_call.1} parent=1 // pred_check
      _
    $region35: #{tpu_custom_call.1} parent=1 // pred_check_branch
      %82 = sbr.rel (0) target = $region37
    $region36: #{tpu_custom_call.1} parent=1 // pred_region
      %83 = dma.done [#allocation6], 32768
    $region37: #{tpu_custom_call.1} parent=1 // pred_fallthru
      _
    // Predicated region
    $region38: #{tpu_custom_call.1} parent=1 // pred_check
      _
    $region39: #{tpu_custom_call.1} parent=1 // pred_check_branch
      %85 = sbr.rel (0) target = $region41
    $region40: #{tpu_custom_call.1} parent=1 // pred_region
      %86 = dma.done [#allocation6], 8192
    $region41: #{tpu_custom_call.1} parent=1 // pred_fallthru
      _
    // Predicated region
    $region42: #{tpu_custom_call.1} parent=1 // pred_check
      _
    $region43: #{tpu_custom_call.1} parent=1 // pred_check_branch
      %88 = sbr.rel (0) target = $region45
    $region44: #{tpu_custom_call.1} parent=1 // pred_region
      %89 = dma.done [#allocation9], 2048
    $region45: #{tpu_custom_call.1} parent=1 // pred_fallthru
      _
    // Predicated region
    $region46: #{tpu_custom_call.1} parent=1 // pred_check
      _
    $region47: #{tpu_custom_call.1} parent=1 // pred_check_branch
      %91 = sbr.rel (0) target = $region49
    $region48: #{tpu_custom_call.1} parent=1 // pred_region
      %92 = dma.done [#allocation9], 2048
    $region49: #{tpu_custom_call.1} parent=1 // pred_fallthru
      _
    %v93 = vld [vmem:[#allocation2] sm:$0xff]
    %v94 = vld [vmem:[#allocation5] sm:$0xff]
    %v95 = vld [vmem:[#allocation5 + $0x8] sm:$0xff]
    %v96 = vld [vmem:[#allocation5 + $0x10] sm:$0xff]
    %v97 = vld [vmem:[#allocation5 + $0x18] sm:$0xff]
    %v98 = vld [vmem:[#allocation5 + $0x20] sm:$0xff]
    %v99 = vld [vmem:[#allocation5 + $0x28] sm:$0xff]
    %v100 = vld [vmem:[#allocation5 + $0x30] sm:$0xff]
    %v101 = vld [vmem:[#allocation5 + $0x38] sm:$0xff]
    %v102 = vld [vmem:[#allocation5 + $0x40] sm:$0xff]
    %v103 = vld [vmem:[#allocation5 + $0x48] sm:$0xff]
    %v104 = vld [vmem:[#allocation5 + $0x50] sm:$0xff]
    %v105 = vld [vmem:[#allocation5 + $0x58] sm:$0xff]
    %v106 = vld [vmem:[#allocation5 + $0x60] sm:$0xff]
    %v107 = vld [vmem:[#allocation5 + $0x68] sm:$0xff]
    %v108 = vld [vmem:[#allocation5 + $0x70] sm:$0xff]
    %v109 = vld [vmem:[#allocation5 + $0x78] sm:$0xff]
    %v110 = vld [vmem:[#allocation5 + $0x80] sm:$0xff]
    %v111 = vld [vmem:[#allocation5 + $0x88] sm:$0xff]
    %v112 = vld [vmem:[#allocation5 + $0x90] sm:$0xff]
    %v113 = vld [vmem:[#allocation5 + $0x98] sm:$0xff]
    %v114 = vld [vmem:[#allocation5 + $0xa0] sm:$0xff]
    %v115 = vld [vmem:[#allocation5 + $0xa8] sm:$0xff]
    %v116 = vld [vmem:[#allocation5 + $0xb0] sm:$0xff]
    %v117 = vld [vmem:[#allocation5 + $0xb8] sm:$0xff]
    %v118 = vld [vmem:[#allocation5 + $0xc0] sm:$0xff]
    %v119 = vld [vmem:[#allocation5 + $0xc8] sm:$0xff]
    %v120 = vld [vmem:[#allocation5 + $0xd0] sm:$0xff]
    %v121 = vld [vmem:[#allocation5 + $0xd8] sm:$0xff]
    %v122 = vld [vmem:[#allocation5 + $0xe0] sm:$0xff]
    %v123 = vld [vmem:[#allocation5 + $0xe8] sm:$0xff]
    %v124 = vld [vmem:[#allocation5 + $0xf0] sm:$0xff]
    %v125 = vld [vmem:[#allocation5 + $0xf8] sm:$0xff]
    %v126 = vld [vmem:[#allocation5 + $0x100] sm:$0xff]
    %v127 = vld [vmem:[#allocation5 + $0x108] sm:$0xff]
    %v128 = vld [vmem:[#allocation5 + $0x110] sm:$0xff]
    %v129 = vld [vmem:[#allocation5 + $0x118] sm:$0xff]
    %v130 = vld [vmem:[#allocation5 + $0x120] sm:$0xff]
    %v131 = vld [vmem:[#allocation5 + $0x128] sm:$0xff]
    %v132 = vld [vmem:[#allocation5 + $0x130] sm:$0xff]
    %v133 = vld [vmem:[#allocation5 + $0x138] sm:$0xff]
    %v134 = vld [vmem:[#allocation5 + $0x140] sm:$0xff]
    %v135 = vld [vmem:[#allocation5 + $0x148] sm:$0xff]
    %v136 = vld [vmem:[#allocation5 + $0x150] sm:$0xff]
    %v137 = vld [vmem:[#allocation5 + $0x158] sm:$0xff]
    %v138 = vld [vmem:[#allocation5 + $0x160] sm:$0xff]
    %v139 = vld [vmem:[#allocation5 + $0x168] sm:$0xff]
    %v140 = vld [vmem:[#allocation5 + $0x170] sm:$0xff]
    %v141 = vld [vmem:[#allocation5 + $0x178] sm:$0xff]
    %v142 = vld [vmem:[#allocation5 + $0x180] sm:$0xff]
    %v143 = vld [vmem:[#allocation5 + $0x188] sm:$0xff]
    %v144 = vld [vmem:[#allocation5 + $0x190] sm:$0xff]
    %v145 = vld [vmem:[#allocation5 + $0x198] sm:$0xff]
    %v146 = vld [vmem:[#allocation5 + $0x1a0] sm:$0xff]
    %v147 = vld [vmem:[#allocation5 + $0x1a8] sm:$0xff]
    %v148 = vld [vmem:[#allocation5 + $0x1b0] sm:$0xff]
    %v149 = vld [vmem:[#allocation5 + $0x1b8] sm:$0xff]
    %v150 = vld [vmem:[#allocation5 + $0x1c0] sm:$0xff]
    %v151 = vld [vmem:[#allocation5 + $0x1c8] sm:$0xff]
    %v152 = vld [vmem:[#allocation5 + $0x1d0] sm:$0xff]
    %v153 = vld [vmem:[#allocation5 + $0x1d8] sm:$0xff]
    %v154 = vld [vmem:[#allocation5 + $0x1e0] sm:$0xff]
    %v155 = vld [vmem:[#allocation5 + $0x1e8] sm:$0xff]
    %v156 = vld [vmem:[#allocation5 + $0x1f0] sm:$0xff]
    %v157 = vld [vmem:[#allocation5 + $0x1f8] sm:$0xff]
    %v158 = vld [vmem:[#allocation5 + $0x200] sm:$0xff]
    %v159 = vld [vmem:[#allocation5 + $0x208] sm:$0xff]
    %v160 = vld [vmem:[#allocation5 + $0x210] sm:$0xff]
    %v161 = vld [vmem:[#allocation5 + $0x218] sm:$0xff]
    %v162 = vld [vmem:[#allocation5 + $0x220] sm:$0xff]
    %v163 = vld [vmem:[#allocation5 + $0x228] sm:$0xff]
    %v164 = vld [vmem:[#allocation5 + $0x230] sm:$0xff]
    %v165 = vld [vmem:[#allocation5 + $0x238] sm:$0xff]
    %v166 = vld [vmem:[#allocation5 + $0x240] sm:$0xff]
    %v167 = vld [vmem:[#allocation5 + $0x248] sm:$0xff]
    %v168 = vld [vmem:[#allocation5 + $0x250] sm:$0xff]
    %v169 = vld [vmem:[#allocation5 + $0x258] sm:$0xff]
    %v170 = vld [vmem:[#allocation5 + $0x260] sm:$0xff]
    %v171 = vld [vmem:[#allocation5 + $0x268] sm:$0xff]
    %v172 = vld [vmem:[#allocation5 + $0x270] sm:$0xff]
    %v173 = vld [vmem:[#allocation5 + $0x278] sm:$0xff]
    %v174 = vld [vmem:[#allocation5 + $0x280] sm:$0xff]
    %v175 = vld [vmem:[#allocation5 + $0x288] sm:$0xff]
    %v176 = vld [vmem:[#allocation5 + $0x290] sm:$0xff]
    %v177 = vld [vmem:[#allocation5 + $0x298] sm:$0xff]
    %v178 = vld [vmem:[#allocation5 + $0x2a0] sm:$0xff]
    %v179 = vld [vmem:[#allocation5 + $0x2a8] sm:$0xff]
    %v180 = vld [vmem:[#allocation5 + $0x2b0] sm:$0xff]
    %v181 = vld [vmem:[#allocation5 + $0x2b8] sm:$0xff]
    %v182 = vld [vmem:[#allocation5 + $0x2c0] sm:$0xff]
    %v183 = vld [vmem:[#allocation5 + $0x2c8] sm:$0xff]
    %v184 = vld [vmem:[#allocation5 + $0x2d0] sm:$0xff]
    %v185 = vld [vmem:[#allocation5 + $0x2d8] sm:$0xff]
    %v186 = vld [vmem:[#allocation5 + $0x2e0] sm:$0xff]
    %v187 = vld [vmem:[#allocation5 + $0x2e8] sm:$0xff]
    %v188 = vld [vmem:[#allocation5 + $0x2f0] sm:$0xff]
    %v189 = vld [vmem:[#allocation5 + $0x2f8] sm:$0xff]
    %v190 = vld [vmem:[#allocation5 + $0x300] sm:$0xff]
    %v191 = vld [vmem:[#allocation5 + $0x308] sm:$0xff]
    %v192 = vld [vmem:[#allocation5 + $0x310] sm:$0xff]
    %v193 = vld [vmem:[#allocation5 + $0x318] sm:$0xff]
    %v194 = vld [vmem:[#allocation5 + $0x320] sm:$0xff]
    %v195 = vld [vmem:[#allocation5 + $0x328] sm:$0xff]
    %v196 = vld [vmem:[#allocation5 + $0x330] sm:$0xff]
    %v197 = vld [vmem:[#allocation5 + $0x338] sm:$0xff]
    %v198 = vld [vmem:[#allocation5 + $0x340] sm:$0xff]
    %v199 = vld [vmem:[#allocation5 + $0x348] sm:$0xff]
    %v200 = vld [vmem:[#allocation5 + $0x350] sm:$0xff]
    %v201 = vld [vmem:[#allocation5 + $0x358] sm:$0xff]
    %v202 = vld [vmem:[#allocation5 + $0x360] sm:$0xff]
    %v203 = vld [vmem:[#allocation5 + $0x368] sm:$0xff]
    %v204 = vld [vmem:[#allocation5 + $0x370] sm:$0xff]
    %v205 = vld [vmem:[#allocation5 + $0x378] sm:$0xff]
    %v206 = vld [vmem:[#allocation5 + $0x380] sm:$0xff]
    %v207 = vld [vmem:[#allocation5 + $0x388] sm:$0xff]
    %v208 = vld [vmem:[#allocation5 + $0x390] sm:$0xff]
    %v209 = vld [vmem:[#allocation5 + $0x398] sm:$0xff]
    %v210 = vld [vmem:[#allocation5 + $0x3a0] sm:$0xff]
    %v211 = vld [vmem:[#allocation5 + $0x3a8] sm:$0xff]
    %v212 = vld [vmem:[#allocation5 + $0x3b0] sm:$0xff]
    %v213 = vld [vmem:[#allocation5 + $0x3b8] sm:$0xff]
    %v214 = vld [vmem:[#allocation5 + $0x3c0] sm:$0xff]
    %v215 = vld [vmem:[#allocation5 + $0x3c8] sm:$0xff]
    %v216 = vld [vmem:[#allocation5 + $0x3d0] sm:$0xff]
    %v217 = vld [vmem:[#allocation5 + $0x3d8] sm:$0xff]
    %v218 = vld [vmem:[#allocation5 + $0x3e0] sm:$0xff]
    %v219 = vld [vmem:[#allocation5 + $0x3e8] sm:$0xff]
    %v220 = vld [vmem:[#allocation5 + $0x3f0] sm:$0xff]
    %v221 = vld [vmem:[#allocation5 + $0x3f8] sm:$0xff]
    %v222 = vld [vmem:[#allocation5 + $0x400] sm:$0xff]
    %v223 = vld [vmem:[#allocation5 + $0x408] sm:$0xff]
    %v224 = vld [vmem:[#allocation5 + $0x410] sm:$0xff]
    %v225 = vld [vmem:[#allocation5 + $0x418] sm:$0xff]
    %v226 = vld [vmem:[#allocation5 + $0x420] sm:$0xff]
    %v227 = vld [vmem:[#allocation5 + $0x428] sm:$0xff]
    %v228 = vld [vmem:[#allocation5 + $0x430] sm:$0xff]
    %v229 = vld [vmem:[#allocation5 + $0x438] sm:$0xff]
    %v230 = vld [vmem:[#allocation5 + $0x440] sm:$0xff]
    %v231 = vld [vmem:[#allocation5 + $0x448] sm:$0xff]
    %v232 = vld [vmem:[#allocation5 + $0x450] sm:$0xff]
    %v233 = vld [vmem:[#allocation5 + $0x458] sm:$0xff]
    %v234 = vld [vmem:[#allocation5 + $0x460] sm:$0xff]
    %v235 = vld [vmem:[#allocation5 + $0x468] sm:$0xff]
    %v236 = vld [vmem:[#allocation5 + $0x470] sm:$0xff]
    %v237 = vld [vmem:[#allocation5 + $0x478] sm:$0xff]
    %v238 = vld [vmem:[#allocation5 + $0x480] sm:$0xff]
    %v239 = vld [vmem:[#allocation5 + $0x488] sm:$0xff]
    %v240 = vld [vmem:[#allocation5 + $0x490] sm:$0xff]
    %v241 = vld [vmem:[#allocation5 + $0x498] sm:$0xff]
    %v242 = vld [vmem:[#allocation5 + $0x4a0] sm:$0xff]
    %v243 = vld [vmem:[#allocation5 + $0x4a8] sm:$0xff]
    %v244 = vld [vmem:[#allocation5 + $0x4b0] sm:$0xff]
    %v245 = vld [vmem:[#allocation5 + $0x4b8] sm:$0xff]
    %v246 = vld [vmem:[#allocation5 + $0x4c0] sm:$0xff]
    %v247 = vld [vmem:[#allocation5 + $0x4c8] sm:$0xff]
    %v248 = vld [vmem:[#allocation5 + $0x4d0] sm:$0xff]
    %v249 = vld [vmem:[#allocation5 + $0x4d8] sm:$0xff]
    %v250 = vld [vmem:[#allocation5 + $0x4e0] sm:$0xff]
    %v251 = vld [vmem:[#allocation5 + $0x4e8] sm:$0xff]
    %v252 = vld [vmem:[#allocation5 + $0x4f0] sm:$0xff]
    %v253 = vld [vmem:[#allocation5 + $0x4f8] sm:$0xff]
    %v254 = vld [vmem:[#allocation5 + $0x500] sm:$0xff]
    %v255 = vld [vmem:[#allocation5 + $0x508] sm:$0xff]
    %v256 = vld [vmem:[#allocation5 + $0x510] sm:$0xff]
    %v257 = vld [vmem:[#allocation5 + $0x518] sm:$0xff]
    %v258 = vld [vmem:[#allocation5 + $0x520] sm:$0xff]
    %v259 = vld [vmem:[#allocation5 + $0x528] sm:$0xff]
    %v260 = vld [vmem:[#allocation5 + $0x530] sm:$0xff]
    %v261 = vld [vmem:[#allocation5 + $0x538] sm:$0xff]
    %v262 = vld [vmem:[#allocation5 + $0x540] sm:$0xff]
    %v263 = vld [vmem:[#allocation5 + $0x548] sm:$0xff]
    %v264 = vld [vmem:[#allocation5 + $0x550] sm:$0xff]
    %v265 = vld [vmem:[#allocation5 + $0x558] sm:$0xff]
    %v266 = vld [vmem:[#allocation5 + $0x560] sm:$0xff]
    %v267 = vld [vmem:[#allocation5 + $0x568] sm:$0xff]
    %v268 = vld [vmem:[#allocation5 + $0x570] sm:$0xff]
    %v269 = vld [vmem:[#allocation5 + $0x578] sm:$0xff]
    %v270 = vld [vmem:[#allocation5 + $0x580] sm:$0xff]
    %v271 = vld [vmem:[#allocation5 + $0x588] sm:$0xff]
    %v272 = vld [vmem:[#allocation5 + $0x590] sm:$0xff]
    %v273 = vld [vmem:[#allocation5 + $0x598] sm:$0xff]
    %v274 = vld [vmem:[#allocation5 + $0x5a0] sm:$0xff]
    %v275 = vld [vmem:[#allocation5 + $0x5a8] sm:$0xff]
    %v276 = vld [vmem:[#allocation5 + $0x5b0] sm:$0xff]
    %v277 = vld [vmem:[#allocation5 + $0x5b8] sm:$0xff]
    %v278 = vld [vmem:[#allocation5 + $0x5c0] sm:$0xff]
    %v279 = vld [vmem:[#allocation5 + $0x5c8] sm:$0xff]
    %v280 = vld [vmem:[#allocation5 + $0x5d0] sm:$0xff]
    %v281 = vld [vmem:[#allocation5 + $0x5d8] sm:$0xff]
    %v282 = vld [vmem:[#allocation5 + $0x5e0] sm:$0xff]
    %v283 = vld [vmem:[#allocation5 + $0x5e8] sm:$0xff]
    %v284 = vld [vmem:[#allocation5 + $0x5f0] sm:$0xff]
    %v285 = vld [vmem:[#allocation5 + $0x5f8] sm:$0xff]
    %v286 = vld [vmem:[#allocation5 + $0x600] sm:$0xff]
    %v287 = vld [vmem:[#allocation5 + $0x608] sm:$0xff]
    %v288 = vld [vmem:[#allocation5 + $0x610] sm:$0xff]
    %v289 = vld [vmem:[#allocation5 + $0x618] sm:$0xff]
    %v290 = vld [vmem:[#allocation5 + $0x620] sm:$0xff]
    %v291 = vld [vmem:[#allocation5 + $0x628] sm:$0xff]
    %v292 = vld [vmem:[#allocation5 + $0x630] sm:$0xff]
    %v293 = vld [vmem:[#allocation5 + $0x638] sm:$0xff]
    %v294 = vld [vmem:[#allocation5 + $0x640] sm:$0xff]
    %v295 = vld [vmem:[#allocation5 + $0x648] sm:$0xff]
    %v296 = vld [vmem:[#allocation5 + $0x650] sm:$0xff]
    %v297 = vld [vmem:[#allocation5 + $0x658] sm:$0xff]
    %v298 = vld [vmem:[#allocation5 + $0x660] sm:$0xff]
    %v299 = vld [vmem:[#allocation5 + $0x668] sm:$0xff]
    %v300 = vld [vmem:[#allocation5 + $0x670] sm:$0xff]
    %v301 = vld [vmem:[#allocation5 + $0x678] sm:$0xff]
    %v302 = vld [vmem:[#allocation5 + $0x680] sm:$0xff]
    %v303 = vld [vmem:[#allocation5 + $0x688] sm:$0xff]
    %v304 = vld [vmem:[#allocation5 + $0x690] sm:$0xff]
    %v305 = vld [vmem:[#allocation5 + $0x698] sm:$0xff]
    %v306 = vld [vmem:[#allocation5 + $0x6a0] sm:$0xff]
    %v307 = vld [vmem:[#allocation5 + $0x6a8] sm:$0xff]
    %v308 = vld [vmem:[#allocation5 + $0x6b0] sm:$0xff]
    %v309 = vld [vmem:[#allocation5 + $0x6b8] sm:$0xff]
    %v310 = vld [vmem:[#allocation5 + $0x6c0] sm:$0xff]
    %v311 = vld [vmem:[#allocation5 + $0x6c8] sm:$0xff]
    %v312 = vld [vmem:[#allocation5 + $0x6d0] sm:$0xff]
    %v313 = vld [vmem:[#allocation5 + $0x6d8] sm:$0xff]
    %v314 = vld [vmem:[#allocation5 + $0x6e0] sm:$0xff]
    %v315 = vld [vmem:[#allocation5 + $0x6e8] sm:$0xff]
    %v316 = vld [vmem:[#allocation5 + $0x6f0] sm:$0xff]
    %v317 = vld [vmem:[#allocation5 + $0x6f8] sm:$0xff]
    %v318 = vld [vmem:[#allocation5 + $0x700] sm:$0xff]
    %v319 = vld [vmem:[#allocation5 + $0x708] sm:$0xff]
    %v320 = vld [vmem:[#allocation5 + $0x710] sm:$0xff]
    %v321 = vld [vmem:[#allocation5 + $0x718] sm:$0xff]
    %v322 = vld [vmem:[#allocation5 + $0x720] sm:$0xff]
    %v323 = vld [vmem:[#allocation5 + $0x728] sm:$0xff]
    %v324 = vld [vmem:[#allocation5 + $0x730] sm:$0xff]
    %v325 = vld [vmem:[#allocation5 + $0x738] sm:$0xff]
    %v326 = vld [vmem:[#allocation5 + $0x740] sm:$0xff]
    %v327 = vld [vmem:[#allocation5 + $0x748] sm:$0xff]
    %v328 = vld [vmem:[#allocation5 + $0x750] sm:$0xff]
    %v329 = vld [vmem:[#allocation5 + $0x758] sm:$0xff]
    %v330 = vld [vmem:[#allocation5 + $0x760] sm:$0xff]
    %v331 = vld [vmem:[#allocation5 + $0x768] sm:$0xff]
    %v332 = vld [vmem:[#allocation5 + $0x770] sm:$0xff]
    %v333 = vld [vmem:[#allocation5 + $0x778] sm:$0xff]
    %v334 = vld [vmem:[#allocation5 + $0x780] sm:$0xff]
    %v335 = vld [vmem:[#allocation5 + $0x788] sm:$0xff]
    %v336 = vld [vmem:[#allocation5 + $0x790] sm:$0xff]
    %v337 = vld [vmem:[#allocation5 + $0x798] sm:$0xff]
    %v338 = vld [vmem:[#allocation5 + $0x7a0] sm:$0xff]
    %v339 = vld [vmem:[#allocation5 + $0x7a8] sm:$0xff]
    %v340 = vld [vmem:[#allocation5 + $0x7b0] sm:$0xff]
    %v341 = vld [vmem:[#allocation5 + $0x7b8] sm:$0xff]
    %v342 = vld [vmem:[#allocation5 + $0x7c0] sm:$0xff]
    %v343 = vld [vmem:[#allocation5 + $0x7c8] sm:$0xff]
    %v344 = vld [vmem:[#allocation5 + $0x7d0] sm:$0xff]
    %v345 = vld [vmem:[#allocation5 + $0x7d8] sm:$0xff]
    %v346 = vld [vmem:[#allocation5 + $0x7e0] sm:$0xff]
    %v347 = vld [vmem:[#allocation5 + $0x7e8] sm:$0xff]
    %v348 = vld [vmem:[#allocation5 + $0x7f0] sm:$0xff]
    %v349 = vld [vmem:[#allocation5 + $0x7f8] sm:$0xff]
    %v350 = vld [vmem:[%s2] sm:$0xf]
    %v352 = vlaneseq
    %v353 = vshrl.u32 %v352, 7
    %v354 = vsub.s32 0, %v353
    %v355 = vrot.slane %v350, %v354
    %v356 = vlaneseq
    %v357 = vshrl.u32 %v356, 7
    %v358 = vsub.s32 1, %v357
    %v359 = vrot.slane %v350, %v358
    %v360 = vlaneseq
    %v361 = vshrl.u32 %v360, 7
    %v362 = vsub.s32 2, %v361
    %v363 = vrot.slane %v350, %v362
    %v364 = vlaneseq
    %v365 = vshrl.u32 %v364, 7
    %v366 = vsub.s32 3, %v365
    %v367 = vrot.slane %v350, %v366
    %v373 = vcombine.high %v93, %v93
    %v375 = vunpack.c.l.s4 1983009808
    %v376 = vunpack.c.0.s8 %v375
    %v377 = vlaneseq
    %v378 = vshrl.u32 %v377, 7
    %v379 = vsub.s32 %v376, %v378
    %v380 = vrot.slane %v93, %v379
    %v382 = vunpack.c.l.s4 1983009808
    %v383 = vunpack.c.0.s8 %v382
    %v384 = vlaneseq
    %v385 = vshrl.u32 %v384, 7
    %v386 = vsub.s32 %v383, %v385
    %v387 = vrot.slane %v373, %v386
    %v388 = vcombine.high %v380, %v380
    %v389 = vcombine.high %v387, %v387
    %394 = vmatprep.subr.mxu0 %v95
    %395 = vmatpush1.msra.mxu0 %v94
    %396 = vmatprep.subr.mxu0 %v99
    %397 = vmatpush1.msra.mxu0 %v98
    %398 = vmatprep.subr.mxu0 %v103
    %399 = vmatpush1.msra.mxu0 %v102
    %400 = vmatprep.subr.mxu0 %v107
    %401 = vmatpush1.msra.mxu0 %v106
    %402 = vmatprep.subr.mxu0 %v111
    %403 = vmatpush1.msra.mxu0 %v110
    %404 = vmatprep.subr.mxu0 %v115
    %405 = vmatpush1.msra.mxu0 %v114
    %406 = vmatprep.subr.mxu0 %v119
    %407 = vmatpush1.msra.mxu0 %v118
    %408 = vmatprep.subr.mxu0 %v123
    %409 = vmatpush1.msra.mxu0 %v122
    %410 = vmatprep.subr.mxu0 %v127
    %411 = vmatpush1.msra.mxu0 %v126
    %412 = vmatprep.subr.mxu0 %v131
    %413 = vmatpush1.msra.mxu0 %v130
    %414 = vmatprep.subr.mxu0 %v135
    %415 = vmatpush1.msra.mxu0 %v134
    %416 = vmatprep.subr.mxu0 %v139
    %417 = vmatpush1.msra.mxu0 %v138
    %418 = vmatprep.subr.mxu0 %v143
    %419 = vmatpush1.msra.mxu0 %v142
    %420 = vmatprep.subr.mxu0 %v147
    %421 = vmatpush1.msra.mxu0 %v146
    %422 = vmatprep.subr.mxu0 %v151
    %423 = vmatpush1.msra.mxu0 %v150
    %424 = vmatprep.subr.mxu0 %v155
    %425 = vmatpush1.msra.mxu0 %v154
    %426 = vmatprep.subr.mxu0 %v159
    %427 = vmatpush1.msra.mxu0 %v158
    %428 = vmatprep.subr.mxu0 %v163
    %429 = vmatpush1.msra.mxu0 %v162
    %430 = vmatprep.subr.mxu0 %v167
    %431 = vmatpush1.msra.mxu0 %v166
    %432 = vmatprep.subr.mxu0 %v171
    %433 = vmatpush1.msra.mxu0 %v170
    %434 = vmatprep.subr.mxu0 %v175
    %435 = vmatpush1.msra.mxu0 %v174
    %436 = vmatprep.subr.mxu0 %v179
    %437 = vmatpush1.msra.mxu0 %v178
    %438 = vmatprep.subr.mxu0 %v183
    %439 = vmatpush1.msra.mxu0 %v182
    %440 = vmatprep.subr.mxu0 %v187
    %441 = vmatpush1.msra.mxu0 %v186
    %442 = vmatprep.subr.mxu0 %v191
    %443 = vmatpush1.msra.mxu0 %v190
    %444 = vmatprep.subr.mxu0 %v195
    %445 = vmatpush1.msra.mxu0 %v194
    %446 = vmatprep.subr.mxu0 %v199
    %447 = vmatpush1.msra.mxu0 %v198
    %448 = vmatprep.subr.mxu0 %v203
    %449 = vmatpush1.msra.mxu0 %v202
    %450 = vmatprep.subr.mxu0 %v207
    %451 = vmatpush1.msra.mxu0 %v206
    %452 = vmatprep.subr.mxu0 %v211
    %453 = vmatpush1.msra.mxu0 %v210
    %454 = vmatprep.subr.mxu0 %v215
    %455 = vmatpush1.msra.mxu0 %v214
    %456 = vmatprep.subr.mxu0 %v219
    %457 = vmatpush1.msra.mxu0 %v218
    %458 = vmatprep.mubr.f32.mxu0 %v388
    %459 = vmatmul.mubr.f32.gmra.mrb[0].mxu0 %v380
    %v460 = vpop.f32.mrb[0].mxu0
    %v461 = vadd.f32 %v355, %v460
    %v462 = vpop.f32.mrb[0].mxu0
    %v463 = vadd.f32 %v359, %v462
    %464 = vdwg.mxu0
    %465 = vmatprep.subr.mxu0 %v223
    %466 = vmatpush1.msra.mxu0 %v222
    %467 = vmatprep.subr.mxu0 %v227
    %468 = vmatpush1.msra.mxu0 %v226
    %469 = vmatprep.subr.mxu0 %v231
    %470 = vmatpush1.msra.mxu0 %v230
    %471 = vmatprep.subr.mxu0 %v235
    %472 = vmatpush1.msra.mxu0 %v234
    %473 = vmatprep.subr.mxu0 %v239
    %474 = vmatpush1.msra.mxu0 %v238
    %475 = vmatprep.subr.mxu0 %v243
    %476 = vmatpush1.msra.mxu0 %v242
    %477 = vmatprep.subr.mxu0 %v247
    %478 = vmatpush1.msra.mxu0 %v246
    %479 = vmatprep.subr.mxu0 %v251
    %480 = vmatpush1.msra.mxu0 %v250
    %481 = vmatprep.subr.mxu0 %v255
    %482 = vmatpush1.msra.mxu0 %v254
    %483 = vmatprep.subr.mxu0 %v259
    %484 = vmatpush1.msra.mxu0 %v258
    %485 = vmatprep.subr.mxu0 %v263
    %486 = vmatpush1.msra.mxu0 %v262
    %487 = vmatprep.subr.mxu0 %v267
    %488 = vmatpush1.msra.mxu0 %v266
    %489 = vmatprep.subr.mxu0 %v271
    %490 = vmatpush1.msra.mxu0 %v270
    %491 = vmatprep.subr.mxu0 %v275
    %492 = vmatpush1.msra.mxu0 %v274
    %493 = vmatprep.subr.mxu0 %v279
    %494 = vmatpush1.msra.mxu0 %v278
    %495 = vmatprep.subr.mxu0 %v283
    %496 = vmatpush1.msra.mxu0 %v282
    %497 = vmatprep.subr.mxu0 %v287
    %498 = vmatpush1.msra.mxu0 %v286
    %499 = vmatprep.subr.mxu0 %v291
    %500 = vmatpush1.msra.mxu0 %v290
    %501 = vmatprep.subr.mxu0 %v295
    %502 = vmatpush1.msra.mxu0 %v294
    %503 = vmatprep.subr.mxu0 %v299
    %504 = vmatpush1.msra.mxu0 %v298
    %505 = vmatprep.subr.mxu0 %v303
    %506 = vmatpush1.msra.mxu0 %v302
    %507 = vmatprep.subr.mxu0 %v307
    %508 = vmatpush1.msra.mxu0 %v306
    %509 = vmatprep.subr.mxu0 %v311
    %510 = vmatpush1.msra.mxu0 %v310
    %511 = vmatprep.subr.mxu0 %v315
    %512 = vmatpush1.msra.mxu0 %v314
    %513 = vmatprep.subr.mxu0 %v319
    %514 = vmatpush1.msra.mxu0 %v318
    %515 = vmatprep.subr.mxu0 %v323
    %516 = vmatpush1.msra.mxu0 %v322
    %517 = vmatprep.subr.mxu0 %v327
    %518 = vmatpush1.msra.mxu0 %v326
    %519 = vmatprep.subr.mxu0 %v331
    %520 = vmatpush1.msra.mxu0 %v330
    %521 = vmatprep.subr.mxu0 %v335
    %522 = vmatpush1.msra.mxu0 %v334
    %523 = vmatprep.subr.mxu0 %v339
    %524 = vmatpush1.msra.mxu0 %v338
    %525 = vmatprep.subr.mxu0 %v343
    %526 = vmatpush1.msra.mxu0 %v342
    %527 = vmatprep.subr.mxu0 %v347
    %528 = vmatpush1.msra.mxu0 %v346
    %529 = vmatprep.mubr.f32.mxu0 %v389
    %530 = vmatmul.mubr.f32.gmra.mrb[0].mxu0 %v387
    %v531 = vpop.f32.mrb[0].mxu0
    %v532 = vadd.f32 %v461, %v531
    %v533 = vpop.f32.mrb[0].mxu0
    %v534 = vadd.f32 %v463, %v533
    %535 = vdwg.mxu0
    %536 = vmatprep.subr.mxu0 %v97
    %537 = vmatpush1.msra.mxu0 %v96
    %538 = vmatprep.subr.mxu0 %v101
    %539 = vmatpush1.msra.mxu0 %v100
    %540 = vmatprep.subr.mxu0 %v105
    %541 = vmatpush1.msra.mxu0 %v104
    %542 = vmatprep.subr.mxu0 %v109
    %543 = vmatpush1.msra.mxu0 %v108
    %544 = vmatprep.subr.mxu0 %v113
    %545 = vmatpush1.msra.mxu0 %v112
    %546 = vmatprep.subr.mxu0 %v117
    %547 = vmatpush1.msra.mxu0 %v116
    %548 = vmatprep.subr.mxu0 %v121
    %549 = vmatpush1.msra.mxu0 %v120
    %550 = vmatprep.subr.mxu0 %v125
    %551 = vmatpush1.msra.mxu0 %v124
    %552 = vmatprep.subr.mxu0 %v129
    %553 = vmatpush1.msra.mxu0 %v128
    %554 = vmatprep.subr.mxu0 %v133
    %555 = vmatpush1.msra.mxu0 %v132
    %556 = vmatprep.subr.mxu0 %v137
    %557 = vmatpush1.msra.mxu0 %v136
    %558 = vmatprep.subr.mxu0 %v141
    %559 = vmatpush1.msra.mxu0 %v140
    %560 = vmatprep.subr.mxu0 %v145
    %561 = vmatpush1.msra.mxu0 %v144
    %562 = vmatprep.subr.mxu0 %v149
    %563 = vmatpush1.msra.mxu0 %v148
    %564 = vmatprep.subr.mxu0 %v153
    %565 = vmatpush1.msra.mxu0 %v152
    %566 = vmatprep.subr.mxu0 %v157
    %567 = vmatpush1.msra.mxu0 %v156
    %568 = vmatprep.subr.mxu0 %v161
    %569 = vmatpush1.msra.mxu0 %v160
    %570 = vmatprep.subr.mxu0 %v165
    %571 = vmatpush1.msra.mxu0 %v164
    %572 = vmatprep.subr.mxu0 %v169
    %573 = vmatpush1.msra.mxu0 %v168
    %574 = vmatprep.subr.mxu0 %v173
    %575 = vmatpush1.msra.mxu0 %v172
    %576 = vmatprep.subr.mxu0 %v177
    %577 = vmatpush1.msra.mxu0 %v176
    %578 = vmatprep.subr.mxu0 %v181
    %579 = vmatpush1.msra.mxu0 %v180
    %580 = vmatprep.subr.mxu0 %v185
    %581 = vmatpush1.msra.mxu0 %v184
    %582 = vmatprep.subr.mxu0 %v189
    %583 = vmatpush1.msra.mxu0 %v188
    %584 = vmatprep.subr.mxu0 %v193
    %585 = vmatpush1.msra.mxu0 %v192
    %586 = vmatprep.subr.mxu0 %v197
    %587 = vmatpush1.msra.mxu0 %v196
    %588 = vmatprep.subr.mxu0 %v201
    %589 = vmatpush1.msra.mxu0 %v200
    %590 = vmatprep.subr.mxu0 %v205
    %591 = vmatpush1.msra.mxu0 %v204
    %592 = vmatprep.subr.mxu0 %v209
    %593 = vmatpush1.msra.mxu0 %v208
    %594 = vmatprep.subr.mxu0 %v213
    %595 = vmatpush1.msra.mxu0 %v212
    %596 = vmatprep.subr.mxu0 %v217
    %597 = vmatpush1.msra.mxu0 %v216
    %598 = vmatprep.subr.mxu0 %v221
    %599 = vmatpush1.msra.mxu0 %v220
    %600 = vmatprep.mubr.f32.mxu0 %v388
    %601 = vmatmul.mubr.f32.gmra.mrb[0].mxu0 %v380
    %v602 = vpop.f32.mrb[0].mxu0
    %v603 = vadd.f32 %v363, %v602
    %v604 = vpop.f32.mrb[0].mxu0
    %v605 = vadd.f32 %v367, %v604
    %606 = vdwg.mxu0
    %607 = vmatprep.subr.mxu0 %v225
    %608 = vmatpush1.msra.mxu0 %v224
    %609 = vmatprep.subr.mxu0 %v229
    %610 = vmatpush1.msra.mxu0 %v228
    %611 = vmatprep.subr.mxu0 %v233
    %612 = vmatpush1.msra.mxu0 %v232
    %613 = vmatprep.subr.mxu0 %v237
    %614 = vmatpush1.msra.mxu0 %v236
    %615 = vmatprep.subr.mxu0 %v241
    %616 = vmatpush1.msra.mxu0 %v240
    %617 = vmatprep.subr.mxu0 %v245
    %618 = vmatpush1.msra.mxu0 %v244
    %619 = vmatprep.subr.mxu0 %v249
    %620 = vmatpush1.msra.mxu0 %v248
    %621 = vmatprep.subr.mxu0 %v253
    %622 = vmatpush1.msra.mxu0 %v252
    %623 = vmatprep.subr.mxu0 %v257
    %624 = vmatpush1.msra.mxu0 %v256
    %625 = vmatprep.subr.mxu0 %v261
    %626 = vmatpush1.msra.mxu0 %v260
    %627 = vmatprep.subr.mxu0 %v265
    %628 = vmatpush1.msra.mxu0 %v264
    %629 = vmatprep.subr.mxu0 %v269
    %630 = vmatpush1.msra.mxu0 %v268
    %631 = vmatprep.subr.mxu0 %v273
    %632 = vmatpush1.msra.mxu0 %v272
    %633 = vmatprep.subr.mxu0 %v277
    %634 = vmatpush1.msra.mxu0 %v276
    %635 = vmatprep.subr.mxu0 %v281
    %636 = vmatpush1.msra.mxu0 %v280
    %637 = vmatprep.subr.mxu0 %v285
    %638 = vmatpush1.msra.mxu0 %v284
    %639 = vmatprep.subr.mxu0 %v289
    %640 = vmatpush1.msra.mxu0 %v288
    %641 = vmatprep.subr.mxu0 %v293
    %642 = vmatpush1.msra.mxu0 %v292
    %643 = vmatprep.subr.mxu0 %v297
    %644 = vmatpush1.msra.mxu0 %v296
    %645 = vmatprep.subr.mxu0 %v301
    %646 = vmatpush1.msra.mxu0 %v300
    %647 = vmatprep.subr.mxu0 %v305
    %648 = vmatpush1.msra.mxu0 %v304
    %649 = vmatprep.subr.mxu0 %v309
    %650 = vmatpush1.msra.mxu0 %v308
    %651 = vmatprep.subr.mxu0 %v313
    %652 = vmatpush1.msra.mxu0 %v312
    %653 = vmatprep.subr.mxu0 %v317
    %654 = vmatpush1.msra.mxu0 %v316
    %655 = vmatprep.subr.mxu0 %v321
    %656 = vmatpush1.msra.mxu0 %v320
    %657 = vmatprep.subr.mxu0 %v325
    %658 = vmatpush1.msra.mxu0 %v324
    %659 = vmatprep.subr.mxu0 %v329
    %660 = vmatpush1.msra.mxu0 %v328
    %661 = vmatprep.subr.mxu0 %v333
    %662 = vmatpush1.msra.mxu0 %v332
    %663 = vmatprep.subr.mxu0 %v337
    %664 = vmatpush1.msra.mxu0 %v336
    %665 = vmatprep.subr.mxu0 %v341
    %666 = vmatpush1.msra.mxu0 %v340
    %667 = vmatprep.subr.mxu0 %v345
    %668 = vmatpush1.msra.mxu0 %v344
    %669 = vmatprep.subr.mxu0 %v349
    %670 = vmatpush1.msra.mxu0 %v348
    %671 = vmatprep.mubr.f32.mxu0 %v389
    %672 = vmatmul.mubr.f32.gmra.mrb[0].mxu0 %v387
    %v673 = vpop.f32.mrb[0].mxu0
    %v674 = vadd.f32 %v603, %v673
    %v675 = vpop.f32.mrb[0].mxu0
    %v676 = vadd.f32 %v605, %v675
    %677 = vdwg.mxu0
    %v678 = vmax.f32 %v532, 0.0
    %v679 = vmax.f32 %v534, 0.0
    %v680 = vmax.f32 %v674, 0.0
    %v681 = vmax.f32 %v676, 0.0
    %v682 = vld [vmem:[#allocation7] sm:$0xff]
    %v683 = vld [vmem:[#allocation7 + $0x8] sm:$0xff]
    %v684 = vld [vmem:[#allocation7 + $0x10] sm:$0xff]
    %v685 = vld [vmem:[#allocation7 + $0x18] sm:$0xff]
    %v686 = vld [vmem:[#allocation7 + $0x20] sm:$0xff]
    %v687 = vld [vmem:[#allocation7 + $0x28] sm:$0xff]
    %v688 = vld [vmem:[#allocation7 + $0x30] sm:$0xff]
    %v689 = vld [vmem:[#allocation7 + $0x38] sm:$0xff]
    %v690 = vld [vmem:[#allocation7 + $0x40] sm:$0xff]
    %v691 = vld [vmem:[#allocation7 + $0x48] sm:$0xff]
    %v692 = vld [vmem:[#allocation7 + $0x50] sm:$0xff]
    %v693 = vld [vmem:[#allocation7 + $0x58] sm:$0xff]
    %v694 = vld [vmem:[#allocation7 + $0x60] sm:$0xff]
    %v695 = vld [vmem:[#allocation7 + $0x68] sm:$0xff]
    %v696 = vld [vmem:[#allocation7 + $0x70] sm:$0xff]
    %v697 = vld [vmem:[#allocation7 + $0x78] sm:$0xff]
    %v698 = vld [vmem:[#allocation7 + $0x80] sm:$0xff]
    %v699 = vld [vmem:[#allocation7 + $0x88] sm:$0xff]
    %v700 = vld [vmem:[#allocation7 + $0x90] sm:$0xff]
    %v701 = vld [vmem:[#allocation7 + $0x98] sm:$0xff]
    %v702 = vld [vmem:[#allocation7 + $0xa0] sm:$0xff]
    %v703 = vld [vmem:[#allocation7 + $0xa8] sm:$0xff]
    %v704 = vld [vmem:[#allocation7 + $0xb0] sm:$0xff]
    %v705 = vld [vmem:[#allocation7 + $0xb8] sm:$0xff]
    %v706 = vld [vmem:[#allocation7 + $0xc0] sm:$0xff]
    %v707 = vld [vmem:[#allocation7 + $0xc8] sm:$0xff]
    %v708 = vld [vmem:[#allocation7 + $0xd0] sm:$0xff]
    %v709 = vld [vmem:[#allocation7 + $0xd8] sm:$0xff]
    %v710 = vld [vmem:[#allocation7 + $0xe0] sm:$0xff]
    %v711 = vld [vmem:[#allocation7 + $0xe8] sm:$0xff]
    %v712 = vld [vmem:[#allocation7 + $0xf0] sm:$0xff]
    %v713 = vld [vmem:[#allocation7 + $0xf8] sm:$0xff]
    %v714 = vld [vmem:[#allocation7 + $0x100] sm:$0xff]
    %v715 = vld [vmem:[#allocation7 + $0x108] sm:$0xff]
    %v716 = vld [vmem:[#allocation7 + $0x110] sm:$0xff]
    %v717 = vld [vmem:[#allocation7 + $0x118] sm:$0xff]
    %v718 = vld [vmem:[#allocation7 + $0x120] sm:$0xff]
    %v719 = vld [vmem:[#allocation7 + $0x128] sm:$0xff]
    %v720 = vld [vmem:[#allocation7 + $0x130] sm:$0xff]
    %v721 = vld [vmem:[#allocation7 + $0x138] sm:$0xff]
    %v722 = vld [vmem:[#allocation7 + $0x140] sm:$0xff]
    %v723 = vld [vmem:[#allocation7 + $0x148] sm:$0xff]
    %v724 = vld [vmem:[#allocation7 + $0x150] sm:$0xff]
    %v725 = vld [vmem:[#allocation7 + $0x158] sm:$0xff]
    %v726 = vld [vmem:[#allocation7 + $0x160] sm:$0xff]
    %v727 = vld [vmem:[#allocation7 + $0x168] sm:$0xff]
    %v728 = vld [vmem:[#allocation7 + $0x170] sm:$0xff]
    %v729 = vld [vmem:[#allocation7 + $0x178] sm:$0xff]
    %v730 = vld [vmem:[#allocation7 + $0x180] sm:$0xff]
    %v731 = vld [vmem:[#allocation7 + $0x188] sm:$0xff]
    %v732 = vld [vmem:[#allocation7 + $0x190] sm:$0xff]
    %v733 = vld [vmem:[#allocation7 + $0x198] sm:$0xff]
    %v734 = vld [vmem:[#allocation7 + $0x1a0] sm:$0xff]
    %v735 = vld [vmem:[#allocation7 + $0x1a8] sm:$0xff]
    %v736 = vld [vmem:[#allocation7 + $0x1b0] sm:$0xff]
    %v737 = vld [vmem:[#allocation7 + $0x1b8] sm:$0xff]
    %v738 = vld [vmem:[#allocation7 + $0x1c0] sm:$0xff]
    %v739 = vld [vmem:[#allocation7 + $0x1c8] sm:$0xff]
    %v740 = vld [vmem:[#allocation7 + $0x1d0] sm:$0xff]
    %v741 = vld [vmem:[#allocation7 + $0x1d8] sm:$0xff]
    %v742 = vld [vmem:[#allocation7 + $0x1e0] sm:$0xff]
    %v743 = vld [vmem:[#allocation7 + $0x1e8] sm:$0xff]
    %v744 = vld [vmem:[#allocation7 + $0x1f0] sm:$0xff]
    %v745 = vld [vmem:[#allocation7 + $0x1f8] sm:$0xff]
    %v746 = vld [vmem:[%s4] sm:$0x1]
    %v748 = vlaneseq
    %v749 = vshrl.u32 %v748, 7
    %v750 = vsub.s32 0, %v749
    %v751 = vrot.slane %v746, %v750
    %753 = vmatprep.subr.mxu0 0.0
    %754 = vmatpush1.msra.mxu0 %v682
    %755 = vmatprep.subr.mxu0 0.0
    %756 = vmatpush1.msra.mxu0 %v683
    %757 = vmatprep.subr.mxu0 0.0
    %758 = vmatpush1.msra.mxu0 %v684
    %759 = vmatprep.subr.mxu0 0.0
    %760 = vmatpush1.msra.mxu0 %v685
    %761 = vmatprep.subr.mxu0 0.0
    %762 = vmatpush1.msra.mxu0 %v686
    %763 = vmatprep.subr.mxu0 0.0
    %764 = vmatpush1.msra.mxu0 %v687
    %765 = vmatprep.subr.mxu0 0.0
    %766 = vmatpush1.msra.mxu0 %v688
    %767 = vmatprep.subr.mxu0 0.0
    %768 = vmatpush1.msra.mxu0 %v689
    %769 = vmatprep.subr.mxu0 0.0
    %770 = vmatpush1.msra.mxu0 %v690
    %771 = vmatprep.subr.mxu0 0.0
    %772 = vmatpush1.msra.mxu0 %v691
    %773 = vmatprep.subr.mxu0 0.0
    %774 = vmatpush1.msra.mxu0 %v692
    %775 = vmatprep.subr.mxu0 0.0
    %776 = vmatpush1.msra.mxu0 %v693
    %777 = vmatprep.subr.mxu0 0.0
    %778 = vmatpush1.msra.mxu0 %v694
    %779 = vmatprep.subr.mxu0 0.0
    %780 = vmatpush1.msra.mxu0 %v695
    %781 = vmatprep.subr.mxu0 0.0
    %782 = vmatpush1.msra.mxu0 %v696
    %783 = vmatprep.subr.mxu0 0.0
    %784 = vmatpush1.msra.mxu0 %v697
    %785 = vmatprep.subr.mxu0 0.0
    %786 = vmatpush1.msra.mxu0 %v698
    %787 = vmatprep.subr.mxu0 0.0
    %788 = vmatpush1.msra.mxu0 %v699
    %789 = vmatprep.subr.mxu0 0.0
    %790 = vmatpush1.msra.mxu0 %v700
    %791 = vmatprep.subr.mxu0 0.0
    %792 = vmatpush1.msra.mxu0 %v701
    %793 = vmatprep.subr.mxu0 0.0
    %794 = vmatpush1.msra.mxu0 %v702
    %795 = vmatprep.subr.mxu0 0.0
    %796 = vmatpush1.msra.mxu0 %v703
    %797 = vmatprep.subr.mxu0 0.0
    %798 = vmatpush1.msra.mxu0 %v704
    %799 = vmatprep.subr.mxu0 0.0
    %800 = vmatpush1.msra.mxu0 %v705
    %801 = vmatprep.subr.mxu0 0.0
    %802 = vmatpush1.msra.mxu0 %v706
    %803 = vmatprep.subr.mxu0 0.0
    %804 = vmatpush1.msra.mxu0 %v707
    %805 = vmatprep.subr.mxu0 0.0
    %806 = vmatpush1.msra.mxu0 %v708
    %807 = vmatprep.subr.mxu0 0.0
    %808 = vmatpush1.msra.mxu0 %v709
    %809 = vmatprep.subr.mxu0 0.0
    %810 = vmatpush1.msra.mxu0 %v710
    %811 = vmatprep.subr.mxu0 0.0
    %812 = vmatpush1.msra.mxu0 %v711
    %813 = vmatprep.subr.mxu0 0.0
    %814 = vmatpush1.msra.mxu0 %v712
    %815 = vmatprep.subr.mxu0 0.0
    %816 = vmatpush1.msra.mxu0 %v713
    %817 = vmatprep.mubr.f32.mxu0 %v679
    %818 = vmatmul.mubr.f32.gmra.mrb[0].mxu0 %v678
    %v819 = vpop.f32.mrb[0].mxu0
    %v820 = vadd.f32 %v751, %v819
    %v821 = vpop.f32.mrb[0].mxu0
    %822 = vdwg.mxu0
    %823 = vmatprep.subr.mxu0 0.0
    %824 = vmatpush1.msra.mxu0 %v714
    %825 = vmatprep.subr.mxu0 0.0
    %826 = vmatpush1.msra.mxu0 %v715
    %827 = vmatprep.subr.mxu0 0.0
    %828 = vmatpush1.msra.mxu0 %v716
    %829 = vmatprep.subr.mxu0 0.0
    %830 = vmatpush1.msra.mxu0 %v717
    %831 = vmatprep.subr.mxu0 0.0
    %832 = vmatpush1.msra.mxu0 %v718
    %833 = vmatprep.subr.mxu0 0.0
    %834 = vmatpush1.msra.mxu0 %v719
    %835 = vmatprep.subr.mxu0 0.0
    %836 = vmatpush1.msra.mxu0 %v720
    %837 = vmatprep.subr.mxu0 0.0
    %838 = vmatpush1.msra.mxu0 %v721
    %839 = vmatprep.subr.mxu0 0.0
    %840 = vmatpush1.msra.mxu0 %v722
    %841 = vmatprep.subr.mxu0 0.0
    %842 = vmatpush1.msra.mxu0 %v723
    %843 = vmatprep.subr.mxu0 0.0
    %844 = vmatpush1.msra.mxu0 %v724
    %845 = vmatprep.subr.mxu0 0.0
    %846 = vmatpush1.msra.mxu0 %v725
    %847 = vmatprep.subr.mxu0 0.0
    %848 = vmatpush1.msra.mxu0 %v726
    %849 = vmatprep.subr.mxu0 0.0
    %850 = vmatpush1.msra.mxu0 %v727
    %851 = vmatprep.subr.mxu0 0.0
    %852 = vmatpush1.msra.mxu0 %v728
    %853 = vmatprep.subr.mxu0 0.0
    %854 = vmatpush1.msra.mxu0 %v729
    %855 = vmatprep.subr.mxu0 0.0
    %856 = vmatpush1.msra.mxu0 %v730
    %857 = vmatprep.subr.mxu0 0.0
    %858 = vmatpush1.msra.mxu0 %v731
    %859 = vmatprep.subr.mxu0 0.0
    %860 = vmatpush1.msra.mxu0 %v732
    %861 = vmatprep.subr.mxu0 0.0
    %862 = vmatpush1.msra.mxu0 %v733
    %863 = vmatprep.subr.mxu0 0.0
    %864 = vmatpush1.msra.mxu0 %v734
    %865 = vmatprep.subr.mxu0 0.0
    %866 = vmatpush1.msra.mxu0 %v735
    %867 = vmatprep.subr.mxu0 0.0
    %868 = vmatpush1.msra.mxu0 %v736
    %869 = vmatprep.subr.mxu0 0.0
    %870 = vmatpush1.msra.mxu0 %v737
    %871 = vmatprep.subr.mxu0 0.0
    %872 = vmatpush1.msra.mxu0 %v738
    %873 = vmatprep.subr.mxu0 0.0
    %874 = vmatpush1.msra.mxu0 %v739
    %875 = vmatprep.subr.mxu0 0.0
    %876 = vmatpush1.msra.mxu0 %v740
    %877 = vmatprep.subr.mxu0 0.0
    %878 = vmatpush1.msra.mxu0 %v741
    %879 = vmatprep.subr.mxu0 0.0
    %880 = vmatpush1.msra.mxu0 %v742
    %881 = vmatprep.subr.mxu0 0.0
    %882 = vmatpush1.msra.mxu0 %v743
    %883 = vmatprep.subr.mxu0 0.0
    %884 = vmatpush1.msra.mxu0 %v744
    %885 = vmatprep.subr.mxu0 0.0
    %886 = vmatpush1.msra.mxu0 %v745
    %887 = vmatprep.mubr.f32.mxu0 %v681
    %888 = vmatmul.mubr.f32.gmra.mrb[0].mxu0 %v680
    %v889 = vpop.f32.mrb[0].mxu0
    %v890 = vadd.f32 %v820, %v889
    %v891 = vpop.f32.mrb[0].mxu0
    %892 = vdwg.mxu0
    %v893 = vmul.f32 %v890, %v890
    %v894 = vld [vmem:[#allocation8] sm:$0xff]
    %v895 = vld [vmem:[#allocation8 + $0x8] sm:$0xff]
    %v896 = vld [vmem:[#allocation8 + $0x10] sm:$0xff]
    %v897 = vld [vmem:[#allocation8 + $0x18] sm:$0xff]
    %v898 = vld [vmem:[#allocation8 + $0x20] sm:$0xff]
    %v899 = vld [vmem:[#allocation8 + $0x28] sm:$0xff]
    %v900 = vld [vmem:[#allocation8 + $0x30] sm:$0xff]
    %v901 = vld [vmem:[#allocation8 + $0x38] sm:$0xff]
    %v902 = vld [vmem:[#allocation8 + $0x40] sm:$0xff]
    %v903 = vld [vmem:[#allocation8 + $0x48] sm:$0xff]
    %v904 = vld [vmem:[#allocation8 + $0x50] sm:$0xff]
    %v905 = vld [vmem:[#allocation8 + $0x58] sm:$0xff]
    %v906 = vld [vmem:[#allocation8 + $0x60] sm:$0xff]
    %v907 = vld [vmem:[#allocation8 + $0x68] sm:$0xff]
    %v908 = vld [vmem:[#allocation8 + $0x70] sm:$0xff]
    %v909 = vld [vmem:[#allocation8 + $0x78] sm:$0xff]
    %910 = vmatprep.subr.mxu0 0.0
    %911 = vmatpush1.msra.mxu0 %v894
    %912 = vmatprep.subr.mxu0 0.0
    %913 = vmatpush1.msra.mxu0 %v895
    %914 = vmatprep.subr.mxu0 0.0
    %915 = vmatpush1.msra.mxu0 %v896
    %916 = vmatprep.subr.mxu0 0.0
    %917 = vmatpush1.msra.mxu0 %v897
    %918 = vmatprep.subr.mxu0 0.0
    %919 = vmatpush1.msra.mxu0 %v898
    %920 = vmatprep.subr.mxu0 0.0
    %921 = vmatpush1.msra.mxu0 %v899
    %922 = vmatprep.subr.mxu0 0.0
    %923 = vmatpush1.msra.mxu0 %v900
    %924 = vmatprep.subr.mxu0 0.0
    %925 = vmatpush1.msra.mxu0 %v901
    %926 = vmatprep.subr.mxu0 0.0
    %927 = vmatpush1.msra.mxu0 %v902
    %928 = vmatprep.subr.mxu0 0.0
    %929 = vmatpush1.msra.mxu0 %v903
    %930 = vmatprep.subr.mxu0 0.0
    %931 = vmatpush1.msra.mxu0 %v904
    %932 = vmatprep.subr.mxu0 0.0
    %933 = vmatpush1.msra.mxu0 %v905
    %934 = vmatprep.subr.mxu0 0.0
    %935 = vmatpush1.msra.mxu0 %v906
    %936 = vmatprep.subr.mxu0 0.0
    %937 = vmatpush1.msra.mxu0 %v907
    %938 = vmatprep.subr.mxu0 0.0
    %939 = vmatpush1.msra.mxu0 %v908
    %940 = vmatprep.subr.mxu0 0.0
    %941 = vmatpush1.msra.mxu0 %v909
    %942 = vmatprep.subr.mxu0 0.0
    %943 = vmatpush1.msra.mxu0 0.0
    %944 = vmatprep.subr.mxu0 0.0
    %945 = vmatpush1.msra.mxu0 0.0
    %946 = vmatprep.subr.mxu0 0.0
    %947 = vmatpush1.msra.mxu0 0.0
    %948 = vmatprep.subr.mxu0 0.0
    %949 = vmatpush1.msra.mxu0 0.0
    %950 = vmatprep.subr.mxu0 0.0
    %951 = vmatpush1.msra.mxu0 0.0
    %952 = vmatprep.subr.mxu0 0.0
    %953 = vmatpush1.msra.mxu0 0.0
    %954 = vmatprep.subr.mxu0 0.0
    %955 = vmatpush1.msra.mxu0 0.0
    %956 = vmatprep.subr.mxu0 0.0
    %957 = vmatpush1.msra.mxu0 0.0
    %958 = vmatprep.subr.mxu0 0.0
    %959 = vmatpush1.msra.mxu0 0.0
    %960 = vmatprep.subr.mxu0 0.0
    %961 = vmatpush1.msra.mxu0 0.0
    %962 = vmatprep.subr.mxu0 0.0
    %963 = vmatpush1.msra.mxu0 0.0
    %964 = vmatprep.subr.mxu0 0.0
    %965 = vmatpush1.msra.mxu0 0.0
    %966 = vmatprep.subr.mxu0 0.0
    %967 = vmatpush1.msra.mxu0 0.0
    %968 = vmatprep.subr.mxu0 0.0
    %969 = vmatpush1.msra.mxu0 0.0
    %970 = vmatprep.subr.mxu0 0.0
    %971 = vmatpush1.msra.mxu0 0.0
    %972 = vmatprep.subr.mxu0 0.0
    %973 = vmatpush1.msra.mxu0 0.0
    %974 = vmatprep.mubr.f32.mxu0 0.0
    %975 = vmatmul.mubr.f32.gmra.mrb[0].mxu0 %v893
    %v976 = vpop.f32.mrb[0].mxu0
    %v977 = vadd.f32 0.0, %v976
    %v978 = vpop.f32.mrb[0].mxu0
    %979 = vdwg.mxu0
    %v980 = vmax.f32 %v977, 1e-24
    %v981 = vrsqrt.pop %v980
    %v982 = vld [vmem:[#allocation10] sm:$0xff]
    %v983 = vld [vmem:[#allocation10 + $0x8] sm:$0xff]
    %v984 = vld [vmem:[#allocation10 + $0x10] sm:$0xff]
    %v985 = vld [vmem:[#allocation10 + $0x18] sm:$0xff]
    %v986 = vld [vmem:[#allocation10 + $0x20] sm:$0xff]
    %v987 = vld [vmem:[#allocation10 + $0x28] sm:$0xff]
    %v988 = vld [vmem:[#allocation10 + $0x30] sm:$0xff]
    %v989 = vld [vmem:[#allocation10 + $0x38] sm:$0xff]
    %v990 = vld [vmem:[#allocation10 + $0x40] sm:$0xff]
    %v991 = vld [vmem:[#allocation10 + $0x48] sm:$0xff]
    %v992 = vld [vmem:[#allocation10 + $0x50] sm:$0xff]
    %v993 = vld [vmem:[#allocation10 + $0x58] sm:$0xff]
    %v994 = vld [vmem:[#allocation10 + $0x60] sm:$0xff]
    %v995 = vld [vmem:[#allocation10 + $0x68] sm:$0xff]
    %v996 = vld [vmem:[#allocation10 + $0x70] sm:$0xff]
    %v997 = vld [vmem:[#allocation10 + $0x78] sm:$0xff]
    %998 = vmatprep.subr.mxu0 0.0
    %999 = vmatpush1.msra.mxu0 %v982
    %1000 = vmatprep.subr.mxu0 0.0
    %1001 = vmatpush1.msra.mxu0 %v983
    %1002 = vmatprep.subr.mxu0 0.0
    %1003 = vmatpush1.msra.mxu0 %v984
    %1004 = vmatprep.subr.mxu0 0.0
    %1005 = vmatpush1.msra.mxu0 %v985
    %1006 = vmatprep.subr.mxu0 0.0
    %1007 = vmatpush1.msra.mxu0 %v986
    %1008 = vmatprep.subr.mxu0 0.0
    %1009 = vmatpush1.msra.mxu0 %v987
    %1010 = vmatprep.subr.mxu0 0.0
    %1011 = vmatpush1.msra.mxu0 %v988
    %1012 = vmatprep.subr.mxu0 0.0
    %1013 = vmatpush1.msra.mxu0 %v989
    %1014 = vmatprep.subr.mxu0 0.0
    %1015 = vmatpush1.msra.mxu0 %v990
    %1016 = vmatprep.subr.mxu0 0.0
    %1017 = vmatpush1.msra.mxu0 %v991
    %1018 = vmatprep.subr.mxu0 0.0
    %1019 = vmatpush1.msra.mxu0 %v992
    %1020 = vmatprep.subr.mxu0 0.0
    %1021 = vmatpush1.msra.mxu0 %v993
    %1022 = vmatprep.subr.mxu0 0.0
    %1023 = vmatpush1.msra.mxu0 %v994
    %1024 = vmatprep.subr.mxu0 0.0
    %1025 = vmatpush1.msra.mxu0 %v995
    %1026 = vmatprep.subr.mxu0 0.0
    %1027 = vmatpush1.msra.mxu0 %v996
    %1028 = vmatprep.subr.mxu0 0.0
    %1029 = vmatpush1.msra.mxu0 %v997
    %1030 = vmatprep.subr.mxu0 0.0
    %1031 = vmatpush1.msra.mxu0 0.0
    %1032 = vmatprep.subr.mxu0 0.0
    %1033 = vmatpush1.msra.mxu0 0.0
    %1034 = vmatprep.subr.mxu0 0.0
    %1035 = vmatpush1.msra.mxu0 0.0
    %1036 = vmatprep.subr.mxu0 0.0
    %1037 = vmatpush1.msra.mxu0 0.0
    %1038 = vmatprep.subr.mxu0 0.0
    %1039 = vmatpush1.msra.mxu0 0.0
    %1040 = vmatprep.subr.mxu0 0.0
    %1041 = vmatpush1.msra.mxu0 0.0
    %1042 = vmatprep.subr.mxu0 0.0
    %1043 = vmatpush1.msra.mxu0 0.0
    %1044 = vmatprep.subr.mxu0 0.0
    %1045 = vmatpush1.msra.mxu0 0.0
    %1046 = vmatprep.subr.mxu0 0.0
    %1047 = vmatpush1.msra.mxu0 0.0
    %1048 = vmatprep.subr.mxu0 0.0
    %1049 = vmatpush1.msra.mxu0 0.0
    %1050 = vmatprep.subr.mxu0 0.0
    %1051 = vmatpush1.msra.mxu0 0.0
    %1052 = vmatprep.subr.mxu0 0.0
    %1053 = vmatpush1.msra.mxu0 0.0
    %1054 = vmatprep.subr.mxu0 0.0
    %1055 = vmatpush1.msra.mxu0 0.0
    %1056 = vmatprep.subr.mxu0 0.0
    %1057 = vmatpush1.msra.mxu0 0.0
    %1058 = vmatprep.subr.mxu0 0.0
    %1059 = vmatpush1.msra.mxu0 0.0
    %1060 = vmatprep.subr.mxu0 0.0
    %1061 = vmatpush1.msra.mxu0 0.0
    %1062 = vmatprep.mubr.f32.mxu0 0.0
    %1063 = vmatmul.mubr.f32.gmra.mrb[0].mxu0 %v981
    %v1064 = vpop.f32.mrb[0].mxu0
    %v1065 = vadd.f32 0.0, %v1064
    %v1066 = vpop.f32.mrb[0].mxu0
    %1067 = vdwg.mxu0
    %v1068 = vlaneseq
    %v1069 = vand.u32 %v1068, 127
    %vm1070 = vcmp.ge.s32.totalorder %v1069, 8
    %vm1071 = vcmp.lt.s32.totalorder %v1069, 72
    %vm1072 = vmand %vm1070, %vm1071
    %v1073 = vmul.f32 %v890, %v1065
    %v1074 = vmax.f32 %v890, 0.0
    %v1075 = vsel %vm1072, 1, 0
    %vm1076 = vcmp.eq.s32.totalorder %v1075, 1
    %v1077 = vsel %vm1076, %v1073, %v1074
    %1078 = vst [vmem:[#allocation11] sm:$0x3] %v1077
    // Predicated region
    $region50: #{tpu_custom_call.1} parent=1 // pred_check
      _
    $region51: #{tpu_custom_call.1} parent=1 // pred_check_branch
      %1080 = sbr.rel (0) target = $region53
    $region52: #{tpu_custom_call.1} parent=1 // pred_region
      %s1082 = ssub.s32 32, 32
      %1083 = vsyncadd [#allocation4], %s1082
      %s1085 = sshll.u32 [#allocation11], 4
      %s1086 = int_to_ptr.vmem [resolvable:$true] %s1085
      %1088 = dma.vmem_to_hbm [thread:$0]  %s1086, 32, %s7, [#allocation4]
    $region53: #{tpu_custom_call.1} parent=1 // pred_fallthru
      _
    // Predicated region
    $region54: #{tpu_custom_call.1} parent=1 // pred_check
      _
    $region55: #{tpu_custom_call.1} parent=1 // pred_check_branch
      %1090 = sbr.rel (0) target = $region57
    $region56: #{tpu_custom_call.1} parent=1 // pred_region
      %1091 = dma.done [#allocation4], 32
    $region57: #{tpu_custom_call.1} parent=1 // pred_fallthru
      _
    %1092 = vsyncpa [#allocation3], 1
    %1093 = vsyncpa [#allocation6], 1
    %1094 = vsyncpa [#allocation9], 1
    %1095 = vsyncpa [#allocation4], 1

</llo_original>
